<compile_context>
chip_gen: v6e
topology: v6e:2x2x1
jax: 0.10.0
libtpu: 0.0.40
codegen_flags: <defaults>
</compile_context>

<pallas_src>
import functools

import jax
import jax.numpy as jnp
from jax import lax
from jax.experimental import pallas as pl
from jax.experimental.pallas import tpu as pltpu


def _round_up(n, m):
    return (n + m - 1) // m * m


def _vmem_capacity_bytes():
    """Per-core VMEM capacity; conservative fallback (v7x = 64 MiB)."""
    try:
        info = pltpu.get_tpu_info()
        for name in ("vmem_capacity_bytes", "vmem_size_bytes", "vmem_bytes"):
            v = getattr(info, name, None)
            if v:
                return int(v)
    except Exception:
        pass
    return 64 * 1024 * 1024


def _gru_kernel(x_ref,       # (t_chunk, Bt, Dp)  streamed input chunk (compute dtype)
                wx_hbm,      # (Dp, 3Hp) in HBM (pl.ANY)  [Wzx | Wrx | Whx]
                bx_ref,      # (1, 3Hp) f32  [bzx+bzh | brx+brh | bhx+bhh]
                wh_hbm,      # (Hp, 2Hp) in HBM (pl.ANY)  [Wzh | Wrh]
                whh_hbm,     # (Hp, Hp) in HBM (pl.ANY)
                h0_ref,      # (Bt, Hp) f32
                out_ref,     # (Bt, Hp) f32 -- also the h carry (VMEM resident)
                wx_v, wh_v, whh_v,   # single-buffered VMEM weight scratch
                sems,        # DMA semaphores (3,)
                xproj_ref,   # (t_chunk, Bt, 3Hp) f32 scratch
                *, t_chunk, bt, hidden, compute_dtype):
    Hp = hidden
    c = pl.program_id(1)          # time-chunk index (arbitrary / sequential)

    # Load the loop-invariant weights exactly once per batch tile (per core)
    # into single-buffered VMEM scratch, and initialize the h carry from h0.
    @pl.when(c == 0)
    def _init():
        cps = (pltpu.make_async_copy(wx_hbm, wx_v, sems.at[0]),
               pltpu.make_async_copy(wh_hbm, wh_v, sems.at[1]),
               pltpu.make_async_copy(whh_hbm, whh_v, sems.at[2]))
        for cp in cps:
            cp.start()
        for cp in cps:
            cp.wait()
        out_ref[...] = h0_ref[...]

    h = out_ref[...]              # f32 carry, resident across the time axis

    # Hoisted x-path projection for the whole chunk: one wide MXU matmul,
    # stored to VMEM scratch so it is NOT held live across the recurrence.
    xc = x_ref[...].reshape(t_chunk * bt, -1).astype(compute_dtype)
    xproj = jnp.dot(xc, wx_v[...], preferred_element_type=jnp.float32) + bx_ref[...]
    xproj_ref[...] = xproj.reshape(t_chunk, bt, 3 * Hp)

    # Serial recurrence: 2 small MXU matmuls per step, operands in bf16,
    # accumulation and all element-wise math in f32.
    def step(ti, h):
        xp = xproj_ref[ti]                                    # (Bt, 3Hp) f32
        hproj = jnp.dot(h.astype(compute_dtype), wh_v[...],
                        preferred_element_type=jnp.float32)   # (Bt, 2Hp)
        zr = jax.nn.sigmoid(xp[:, :2 * Hp] + hproj)           # fused z|r sigmoid
        z = zr[:, :Hp]
        r = zr[:, Hp:]
        h_cand = jax.nn.sigmoid(
            xp[:, 2 * Hp:]
            + jnp.dot((r * h).astype(compute_dtype), whh_v[...],
                      preferred_element_type=jnp.float32))
        return h + z * (h_cand - h)                           # == (1-z)*h + z*h_cand

    # TODO(synk): for tiny-batch latency-bound cases, stage Wh/Whh via
    # pltpu.matmul_push_rhs once per chunk instead of per-step jnp.dot.
    h = lax.fori_loop(0, t_chunk, step, h, unroll=True)

    out_ref[...] = h


def gru_forward(x, params, h0=None, *, t_chunk=None, batch_tile=None, use_bf16=True):
    """x: (T, B, D) float32.  Returns the final hidden state (B, H)."""
    T, B, D = x.shape
    H = params["wzx"].shape[1]
    assert D == H, "module semantics require input_dim == hidden_dim"
    if h0 is None:
        h0 = jnp.zeros((B, H), jnp.float32)

    compute_dtype = jnp.bfloat16 if use_bf16 else jnp.float32
    itemsize = 2 if use_bf16 else 4

    # Hardware-grain padding: batch -> x8 sublanes, hidden/input -> x128 lanes.
    Bp = _round_up(B, 8)
    Hp = _round_up(H, 128)
    Dp = Hp

    # Leading batch-parallel axis (megacore on v7x; harmless elsewhere).
    if batch_tile is None:
        batch_tile = Bp // 2 if Bp % 16 == 0 else Bp
    assert Bp % batch_tile == 0 and batch_tile % 8 == 0
    if use_bf16 and batch_tile != Bp and batch_tile % 16 != 0:
        batch_tile = Bp        # keep bf16 x blocks sublane-tile aligned
    n_btiles = Bp // batch_tile

    # Generation-aware VMEM budget (v7x: 64 MiB/core, v5e/v6e: 128 MiB).
    vmem_cap = _vmem_capacity_bytes()
    vmem_limit = max(int(vmem_cap * 0.75), 32 * 1024 * 1024)   # leave headroom
    budget = int(vmem_cap * 0.6)
    weight_bytes = (Dp * 3 * Hp + Hp * 2 * Hp + Hp * Hp) * itemsize
    fixed = weight_bytes + 4 * batch_tile * Hp * 4 + 2 * 3 * Hp * 4

    if t_chunk is None:
        t_chunk = 1
        for tc in range(1, min(T, 16) + 1):        # cap unroll at 16 steps
            if T % tc:
                continue
            stream = 2 * tc * batch_tile * Dp * itemsize       # double-buffered x
            xproj_bytes = tc * batch_tile * 3 * Hp * 4
            if fixed + stream + xproj_bytes <= budget:
                t_chunk = tc
    assert T % t_chunk == 0
    n_chunks = T // t_chunk

    def pad2(a, rows, cols):
        return jnp.pad(a, ((0, rows - a.shape[0]), (0, cols - a.shape[1])))

    # Fused / pre-summed parameters (host-side layout plumbing).
    wx = jnp.concatenate([pad2(params["wzx"], Dp, Hp),
                          pad2(params["wrx"], Dp, Hp),
                          pad2(params["whx"], Dp, Hp)], axis=1).astype(compute_dtype)
    wh = jnp.concatenate([pad2(params["wzh"], Hp, Hp),
                          pad2(params["wrh"], Hp, Hp)], axis=1).astype(compute_dtype)
    whh = pad2(params["whh"], Hp, Hp).astype(compute_dtype)
    bx = jnp.concatenate([pad2(params["bzx"] + params["bzh"], 1, Hp),
                          pad2(params["brx"] + params["brh"], 1, Hp),
                          pad2(params["bhx"] + params["bhh"], 1, Hp)],
                         axis=1).astype(jnp.float32)                 # (1, 3Hp)

    xp = jnp.pad(x.astype(jnp.float32),
                 ((0, 0), (0, Bp - B), (0, Dp - D))).astype(compute_dtype)  # (T, Bp, Dp)
    h0p = pad2(h0.astype(jnp.float32), Bp, Hp)

    grid_spec = pltpu.PrefetchScalarGridSpec(
        num_scalar_prefetch=0,
        grid=(n_btiles, n_chunks),
        in_specs=[
            pl.BlockSpec((t_chunk, batch_tile, Dp), lambda bt, c: (c, bt, 0)),  # x
            pl.BlockSpec(memory_space=pl.ANY),                                  # wx
            pl.BlockSpec((1, 3 * Hp), lambda bt, c: (0, 0)),                    # bx
            pl.BlockSpec(memory_space=pl.ANY),                                  # wh
            pl.BlockSpec(memory_space=pl.ANY),                                  # whh
            pl.BlockSpec((batch_tile, Hp), lambda bt, c: (bt, 0)),              # h0
        ],
        out_specs=pl.BlockSpec((batch_tile, Hp), lambda bt, c: (bt, 0)),
        scratch_shapes=[
            pltpu.VMEM((Dp, 3 * Hp), compute_dtype),      # wx (single-buffered)
            pltpu.VMEM((Hp, 2 * Hp), compute_dtype),      # wh
            pltpu.VMEM((Hp, Hp), compute_dtype),          # whh
            pltpu.SemaphoreType.DMA((3,)),
            pltpu.VMEM((t_chunk, batch_tile, 3 * Hp), jnp.float32),   # xproj
        ],
    )

    kernel = functools.partial(_gru_kernel, t_chunk=t_chunk, bt=batch_tile,
                               hidden=Hp, compute_dtype=compute_dtype)

    out_padded = pl.pallas_call(
        kernel,
        out_shape=jax.ShapeDtypeStruct((Bp, Hp), jnp.float32),
        grid_spec=grid_spec,
        compiler_params=pltpu.CompilerParams(
            dimension_semantics=("parallel", "arbitrary"),   # batch || , time seq
            vmem_limit_bytes=vmem_limit,
        ),
    )(xp, wx, bx, wh, whh, h0p)

    return out_padded[:B, :H]


def gru_reference(x, params, h0=None):
    """Plain-JAX reference matching the PyTorch forward exactly (f32)."""
    T, B, D = x.shape
    H = params["wzx"].shape[1]
    h = jnp.zeros((B, H), jnp.float32) if h0 is None else h0
    for t in range(T):
        xt = x[t]
        z = jax.nn.sigmoid(xt @ params["wzx"] + params["bzx"]
                           + h @ params["wzh"] + params["bzh"])
        r = jax.nn.sigmoid(xt @ params["wrx"] + params["brx"]
                           + h @ params["wrh"] + params["brh"])
        h_cand = jax.nn.sigmoid(xt @ params["whx"] + params["bhx"]
                                + (r * h) @ params["whh"] + params["bhh"])
        h = (1.0 - z) * h + z * h_cand
    return h


def init_params(key, input_dim, hidden_dim):
    """nn.Linear-style init (uniform +/- 1/sqrt(fan_in)); weights transposed (D,H)."""
    params = {}
    bound = 1.0 / (input_dim ** 0.5)
    names = ["zx", "zh", "rx", "rh", "hx", "hh"]
    keys = jax.random.split(key, 2 * len(names))
    for i, n in enumerate(names):
        params[f"w{n}"] = jax.random.uniform(
            keys[2 * i], (input_dim, hidden_dim), jnp.float32, -bound, bound)
        params[f"b{n}"] = jax.random.uniform(
            keys[2 * i + 1], (1, hidden_dim), jnp.float32, -bound, bound)
    return params


if __name__ == "__main__":
    seq_len, batch, dim = 8, 2, 32   # input_dim == hidden_dim == 32

    key = jax.random.PRNGKey(0)
    kx, kp = jax.random.split(key)
    x = jax.random.normal(kx, (seq_len, batch, dim), jnp.float32)
    params = init_params(kp, dim, dim)
    ref = gru_reference(x, params)

    # Structure/correctness check with f32 matmuls (tight tolerance).
    out_f32 = jax.block_until_ready(gru_forward(x, params, use_bf16=False))
    assert out_f32.shape == (batch, dim)
    assert jnp.allclose(out_f32, ref, atol=1e-4, rtol=1e-4), "f32 path mismatch"

    # Fast path: bf16 MXU operands, f32 accumulation / element-wise math.
    out = jax.block_until_ready(gru_forward(x, params))
    assert out.shape == (batch, dim)
    assert jnp.allclose(out, ref, atol=3e-2, rtol=0), "bf16 path mismatch"

    # Exercise multi-chunk carry, 2 batch tiles (parallel axis) and padding.
    x2 = jax.random.normal(jax.random.PRNGKey(1), (8, 32, dim), jnp.float32)
    out2 = jax.block_until_ready(gru_forward(x2, params, t_chunk=2))
    ref2 = gru_reference(x2, params)
    assert jnp.allclose(out2, ref2, atol=3e-2, rtol=0), "tiled path mismatch"

    print("KERNEL_OK")
</pallas_src>

<mosaic_0001>
module attributes {stable_mosaic.version = 11 : i64} {
  func.func @_gru_kernel(%arg0: i32, %arg1: i32, %arg2: memref<8x8x128xf32, #tpu.memory_space<vmem>>, %arg3: memref<128x384xf32, #tpu.memory_space<any>>, %arg4: memref<1x384xf32, #tpu.memory_space<vmem>>, %arg5: memref<128x256xf32, #tpu.memory_space<any>>, %arg6: memref<128x128xf32, #tpu.memory_space<any>>, %arg7: memref<8x128xf32, #tpu.memory_space<vmem>>, %arg8: memref<8x128xf32, #tpu.memory_space<vmem>>, %arg9: memref<128x384xf32, #tpu.memory_space<vmem>>, %arg10: memref<128x256xf32, #tpu.memory_space<vmem>>, %arg11: memref<128x128xf32, #tpu.memory_space<vmem>>, %arg12: memref<3x!tpu.dma_semaphore, #tpu.memory_space<semaphore_mem>>, %arg13: memref<8x8x384xf32, #tpu.memory_space<vmem>>) attributes {dimension_semantics = [#tpu.dimension_semantics<parallel>, #tpu.dimension_semantics<arbitrary>], iteration_bounds = array<i64: 1, 1>, scalar_prefetch = 0 : i64, scratch_operands = 5 : i64, tpu.core_type = #tpu.core_type<tc>, window_params = [{transform_indices = @transform_0, window_bounds = array<i64: 8, 8, 128>}, {}, {pipeline_mode = #tpu.pipeline_mode<synchronous>, transform_indices = @transform_2, window_bounds = array<i64: 1, 384>}, {}, {}, {transform_indices = @transform_5, window_bounds = array<i64: 8, 128>}, {transform_indices = @transform_6, window_bounds = array<i64: 8, 128>}]} {
    %c0_i32 = arith.constant 0 : i32
    %0 = arith.cmpi eq, %arg1, %c0_i32 : i32
    %1 = arith.extui %0 : i1 to i32
    %c0_i32_0 = arith.constant 0 : i32
    %2 = arith.cmpi ne, %1, %c0_i32_0 : i32
    scf.if %2 {
      %c0_i32_95 = arith.constant 0 : i32
      %230 = tpu.memref_slice %arg12[%c0_i32_95] : memref<3x!tpu.dma_semaphore, #tpu.memory_space<semaphore_mem>> -> memref<1x!tpu.dma_semaphore, #tpu.memory_space<semaphore_mem>>
      %231 = tpu.memref_squeeze %230 : memref<1x!tpu.dma_semaphore, #tpu.memory_space<semaphore_mem>> -> memref<!tpu.dma_semaphore, #tpu.memory_space<semaphore_mem>>
      tpu.enqueue_dma source(%arg3 : memref<128x384xf32, #tpu.memory_space<any>>) target(%arg9 : memref<128x384xf32, #tpu.memory_space<vmem>>) target_semaphore(%231 : memref<!tpu.dma_semaphore, #tpu.memory_space<semaphore_mem>>)
      %c1_i32_96 = arith.constant 1 : i32
      %232 = tpu.memref_slice %arg12[%c1_i32_96] : memref<3x!tpu.dma_semaphore, #tpu.memory_space<semaphore_mem>> -> memref<1x!tpu.dma_semaphore, #tpu.memory_space<semaphore_mem>>
      %233 = tpu.memref_squeeze %232 : memref<1x!tpu.dma_semaphore, #tpu.memory_space<semaphore_mem>> -> memref<!tpu.dma_semaphore, #tpu.memory_space<semaphore_mem>>
      tpu.enqueue_dma source(%arg5 : memref<128x256xf32, #tpu.memory_space<any>>) target(%arg10 : memref<128x256xf32, #tpu.memory_space<vmem>>) target_semaphore(%233 : memref<!tpu.dma_semaphore, #tpu.memory_space<semaphore_mem>>)
      %c2_i32_97 = arith.constant 2 : i32
      %234 = tpu.memref_slice %arg12[%c2_i32_97] : memref<3x!tpu.dma_semaphore, #tpu.memory_space<semaphore_mem>> -> memref<1x!tpu.dma_semaphore, #tpu.memory_space<semaphore_mem>>
      %235 = tpu.memref_squeeze %234 : memref<1x!tpu.dma_semaphore, #tpu.memory_space<semaphore_mem>> -> memref<!tpu.dma_semaphore, #tpu.memory_space<semaphore_mem>>
      tpu.enqueue_dma source(%arg6 : memref<128x128xf32, #tpu.memory_space<any>>) target(%arg11 : memref<128x128xf32, #tpu.memory_space<vmem>>) target_semaphore(%235 : memref<!tpu.dma_semaphore, #tpu.memory_space<semaphore_mem>>)
      %c0_i32_98 = arith.constant 0 : i32
      %236 = tpu.memref_slice %arg12[%c0_i32_98] : memref<3x!tpu.dma_semaphore, #tpu.memory_space<semaphore_mem>> -> memref<1x!tpu.dma_semaphore, #tpu.memory_space<semaphore_mem>>
      %237 = tpu.memref_squeeze %236 : memref<1x!tpu.dma_semaphore, #tpu.memory_space<semaphore_mem>> -> memref<!tpu.dma_semaphore, #tpu.memory_space<semaphore_mem>>
      tpu.wait_dma2 semaphore(%237 : memref<!tpu.dma_semaphore, #tpu.memory_space<semaphore_mem>>) src(%arg3 : memref<128x384xf32, #tpu.memory_space<any>>) dst(%arg9 : memref<128x384xf32, #tpu.memory_space<vmem>>)
      %c1_i32_99 = arith.constant 1 : i32
      %238 = tpu.memref_slice %arg12[%c1_i32_99] : memref<3x!tpu.dma_semaphore, #tpu.memory_space<semaphore_mem>> -> memref<1x!tpu.dma_semaphore, #tpu.memory_space<semaphore_mem>>
      %239 = tpu.memref_squeeze %238 : memref<1x!tpu.dma_semaphore, #tpu.memory_space<semaphore_mem>> -> memref<!tpu.dma_semaphore, #tpu.memory_space<semaphore_mem>>
      tpu.wait_dma2 semaphore(%239 : memref<!tpu.dma_semaphore, #tpu.memory_space<semaphore_mem>>) src(%arg5 : memref<128x256xf32, #tpu.memory_space<any>>) dst(%arg10 : memref<128x256xf32, #tpu.memory_space<vmem>>)
      %c2_i32_100 = arith.constant 2 : i32
      %240 = tpu.memref_slice %arg12[%c2_i32_100] : memref<3x!tpu.dma_semaphore, #tpu.memory_space<semaphore_mem>> -> memref<1x!tpu.dma_semaphore, #tpu.memory_space<semaphore_mem>>
      %241 = tpu.memref_squeeze %240 : memref<1x!tpu.dma_semaphore, #tpu.memory_space<semaphore_mem>> -> memref<!tpu.dma_semaphore, #tpu.memory_space<semaphore_mem>>
      tpu.wait_dma2 semaphore(%241 : memref<!tpu.dma_semaphore, #tpu.memory_space<semaphore_mem>>) src(%arg6 : memref<128x128xf32, #tpu.memory_space<any>>) dst(%arg11 : memref<128x128xf32, #tpu.memory_space<vmem>>)
      %c0_101 = arith.constant 0 : index
      %c0_102 = arith.constant 0 : index
      %242 = vector.load %arg7[%c0_101, %c0_102] : memref<8x128xf32, #tpu.memory_space<vmem>>, vector<8x128xf32>
      %c0_103 = arith.constant 0 : index
      %c0_104 = arith.constant 0 : index
      %243 = vector.load %arg8[%c0_103, %c0_104] : memref<8x128xf32, #tpu.memory_space<vmem>>, vector<8x128xf32>
      tpu.vector_store %arg8[%c0_103, %c0_104], %242 {strides = array<i32>} : memref<8x128xf32, #tpu.memory_space<vmem>>, vector<8x128xf32>,
    } else {
    }
    %c0 = arith.constant 0 : index
    %c0_1 = arith.constant 0 : index
    %3 = vector.load %arg8[%c0, %c0_1] : memref<8x128xf32, #tpu.memory_space<vmem>>, vector<8x128xf32>
    %c0_2 = arith.constant 0 : index
    %c0_3 = arith.constant 0 : index
    %c0_4 = arith.constant 0 : index
    %4 = vector.load %arg2[%c0_2, %c0_3, %c0_4] : memref<8x8x128xf32, #tpu.memory_space<vmem>>, vector<8x8x128xf32>
    %5 = vector.shape_cast %4 : vector<8x8x128xf32> to vector<64x128xf32>
    %c0_5 = arith.constant 0 : index
    %c0_6 = arith.constant 0 : index
    %6 = vector.load %arg9[%c0_5, %c0_6] : memref<128x384xf32, #tpu.memory_space<vmem>>, vector<128x384xf32>
    %cst = arith.constant dense<0.000000e+00> : vector<64x384xf32>
    %7 = tpu.matmul %5, %6, %cst {dimension_numbers = #tpu.dot_dimension_numbers<[1], [0], [0], [1], [0, 0, 1, 1], [], []>} : vector<64x128xf32>, vector<128x384xf32>, vector<64x384xf32> -> vector<64x384xf32>
    %c0_7 = arith.constant 0 : index
    %c0_8 = arith.constant 0 : index
    %8 = vector.load %arg4[%c0_7, %c0_8] : memref<1x384xf32, #tpu.memory_space<vmem>>, vector<1x384xf32>
    %9 = vector.broadcast %8 : vector<1x384xf32> to vector<64x384xf32>
    %10 = arith.addf %7, %9 : vector<64x384xf32>
    %11 = vector.shape_cast %10 : vector<64x384xf32> to vector<8x8x384xf32>
    %c0_9 = arith.constant 0 : index
    %c0_10 = arith.constant 0 : index
    %c0_11 = arith.constant 0 : index
    %12 = vector.load %arg13[%c0_9, %c0_10, %c0_11] : memref<8x8x384xf32, #tpu.memory_space<vmem>>, vector<8x8x384xf32>
    tpu.vector_store %arg13[%c0_9, %c0_10, %c0_11], %11 {strides = array<i32>} : memref<8x8x384xf32, #tpu.memory_space<vmem>>, vector<8x8x384xf32>,
    %c0_i32_12 = arith.constant 0 : i32
    %13 = arith.index_cast %c0_i32_12 : i32 to index
    %c0_13 = arith.constant 0 : index
    %c0_14 = arith.constant 0 : index
    %14 = vector.load %arg13[%13, %c0_13, %c0_14] : memref<8x8x384xf32, #tpu.memory_space<vmem>>, vector<1x8x384xf32>
    %15 = vector.shape_cast %14 : vector<1x8x384xf32> to vector<8x384xf32>
    %c0_15 = arith.constant 0 : index
    %c0_16 = arith.constant 0 : index
    %16 = vector.load %arg10[%c0_15, %c0_16] : memref<128x256xf32, #tpu.memory_space<vmem>>, vector<128x256xf32>
    %cst_17 = arith.constant dense<0.000000e+00> : vector<8x256xf32>
    %17 = tpu.matmul %3, %16, %cst_17 {dimension_numbers = #tpu.dot_dimension_numbers<[1], [0], [0], [1], [0, 0, 1, 1], [], []>} : vector<8x128xf32>, vector<128x256xf32>, vector<8x256xf32> -> vector<8x256xf32>
    %18 = vector.extract_strided_slice %15 {offsets = [0, 0], sizes = [8, 256], strides = [1, 1]} : vector<8x384xf32> to vector<8x256xf32>
    %19 = arith.addf %18, %17 : vector<8x256xf32>
    %20 = arith.negf %19 : vector<8x256xf32>
    %21 = math.exp %20 : vector<8x256xf32>
    %cst_18 = arith.constant 1.000000e+00 : f32
    %22 = vector.broadcast %cst_18 : f32 to vector<8x256xf32>
    %23 = arith.addf %22, %21 : vector<8x256xf32>
    %24 = arith.divf %22, %23 : vector<8x256xf32>
    %25 = vector.extract_strided_slice %24 {offsets = [0, 0], sizes = [8, 128], strides = [1, 1]} : vector<8x256xf32> to vector<8x128xf32>
    %26 = vector.extract_strided_slice %24 {offsets = [0, 128], sizes = [8, 128], strides = [1, 1]} : vector<8x256xf32> to vector<8x128xf32>
    %27 = vector.extract_strided_slice %15 {offsets = [0, 256], sizes = [8, 128], strides = [1, 1]} : vector<8x384xf32> to vector<8x128xf32>
    %28 = arith.mulf %26, %3 : vector<8x128xf32>
    %c0_19 = arith.constant 0 : index
    %c0_20 = arith.constant 0 : index
    %29 = vector.load %arg11[%c0_19, %c0_20] : memref<128x128xf32, #tpu.memory_space<vmem>>, vector<128x128xf32>
    %cst_21 = arith.constant dense<0.000000e+00> : vector<8x128xf32>
    %30 = tpu.matmul %28, %29, %cst_21 {dimension_numbers = #tpu.dot_dimension_numbers<[1], [0], [0], [1], [0, 0, 1, 1], [], []>} : vector<8x128xf32>, vector<128x128xf32>, vector<8x128xf32> -> vector<8x128xf32>
    %31 = arith.addf %27, %30 : vector<8x128xf32>
    %32 = arith.negf %31 : vector<8x128xf32>
    %33 = math.exp %32 : vector<8x128xf32>
    %cst_22 = arith.constant 1.000000e+00 : f32
    %34 = vector.broadcast %cst_22 : f32 to vector<8x128xf32>
    %35 = arith.addf %34, %33 : vector<8x128xf32>
    %36 = arith.divf %34, %35 : vector<8x128xf32>
    %37 = arith.subf %36, %3 : vector<8x128xf32>
    %38 = arith.mulf %25, %37 : vector<8x128xf32>
    %39 = arith.addf %3, %38 : vector<8x128xf32>
    %c1_i32 = arith.constant 1 : i32
    %40 = arith.index_cast %c1_i32 : i32 to index
    %c0_23 = arith.constant 0 : index
    %c0_24 = arith.constant 0 : index
    %41 = vector.load %arg13[%40, %c0_23, %c0_24] : memref<8x8x384xf32, #tpu.memory_space<vmem>>, vector<1x8x384xf32>
    %42 = vector.shape_cast %41 : vector<1x8x384xf32> to vector<8x384xf32>
    %c0_25 = arith.constant 0 : index
    %c0_26 = arith.constant 0 : index
    %43 = vector.load %arg10[%c0_25, %c0_26] : memref<128x256xf32, #tpu.memory_space<vmem>>, vector<128x256xf32>
    %cst_27 = arith.constant dense<0.000000e+00> : vector<8x256xf32>
    %44 = tpu.matmul %39, %43, %cst_27 {dimension_numbers = #tpu.dot_dimension_numbers<[1], [0], [0], [1], [0, 0, 1, 1], [], []>} : vector<8x128xf32>, vector<128x256xf32>, vector<8x256xf32> -> vector<8x256xf32>
    %45 = vector.extract_strided_slice %42 {offsets = [0, 0], sizes = [8, 256], strides = [1, 1]} : vector<8x384xf32> to vector<8x256xf32>
    %46 = arith.addf %45, %44 : vector<8x256xf32>
    %47 = arith.negf %46 : vector<8x256xf32>
    %48 = math.exp %47 : vector<8x256xf32>
    %cst_28 = arith.constant 1.000000e+00 : f32
    %49 = vector.broadcast %cst_28 : f32 to vector<8x256xf32>
    %50 = arith.addf %49, %48 : vector<8x256xf32>
    %51 = arith.divf %49, %50 : vector<8x256xf32>
    %52 = vector.extract_strided_slice %51 {offsets = [0, 0], sizes = [8, 128], strides = [1, 1]} : vector<8x256xf32> to vector<8x128xf32>
    %53 = vector.extract_strided_slice %51 {offsets = [0, 128], sizes = [8, 128], strides = [1, 1]} : vector<8x256xf32> to vector<8x128xf32>
    %54 = vector.extract_strided_slice %42 {offsets = [0, 256], sizes = [8, 128], strides = [1, 1]} : vector<8x384xf32> to vector<8x128xf32>
    %55 = arith.mulf %53, %39 : vector<8x128xf32>
    %c0_29 = arith.constant 0 : index
    %c0_30 = arith.constant 0 : index
    %56 = vector.load %arg11[%c0_29, %c0_30] : memref<128x128xf32, #tpu.memory_space<vmem>>, vector<128x128xf32>
    %cst_31 = arith.constant dense<0.000000e+00> : vector<8x128xf32>
    %57 = tpu.matmul %55, %56, %cst_31 {dimension_numbers = #tpu.dot_dimension_numbers<[1], [0], [0], [1], [0, 0, 1, 1], [], []>} : vector<8x128xf32>, vector<128x128xf32>, vector<8x128xf32> -> vector<8x128xf32>
    %58 = arith.addf %54, %57 : vector<8x128xf32>
    %59 = arith.negf %58 : vector<8x128xf32>
    %60 = math.exp %59 : vector<8x128xf32>
    %cst_32 = arith.constant 1.000000e+00 : f32
    %61 = vector.broadcast %cst_32 : f32 to vector<8x128xf32>
    %62 = arith.addf %61, %60 : vector<8x128xf32>
    %63 = arith.divf %61, %62 : vector<8x128xf32>
    %64 = arith.subf %63, %39 : vector<8x128xf32>
    %65 = arith.mulf %52, %64 : vector<8x128xf32>
    %66 = arith.addf %39, %65 : vector<8x128xf32>
    %c2_i32 = arith.constant 2 : i32
    %67 = arith.index_cast %c2_i32 : i32 to index
    %c0_33 = arith.constant 0 : index
    %c0_34 = arith.constant 0 : index
    %68 = vector.load %arg13[%67, %c0_33, %c0_34] : memref<8x8x384xf32, #tpu.memory_space<vmem>>, vector<1x8x384xf32>
    %69 = vector.shape_cast %68 : vector<1x8x384xf32> to vector<8x384xf32>
    %c0_35 = arith.constant 0 : index
    %c0_36 = arith.constant 0 : index
    %70 = vector.load %arg10[%c0_35, %c0_36] : memref<128x256xf32, #tpu.memory_space<vmem>>, vector<128x256xf32>
    %cst_37 = arith.constant dense<0.000000e+00> : vector<8x256xf32>
    %71 = tpu.matmul %66, %70, %cst_37 {dimension_numbers = #tpu.dot_dimension_numbers<[1], [0], [0], [1], [0, 0, 1, 1], [], []>} : vector<8x128xf32>, vector<128x256xf32>, vector<8x256xf32> -> vector<8x256xf32>
    %72 = vector.extract_strided_slice %69 {offsets = [0, 0], sizes = [8, 256], strides = [1, 1]} : vector<8x384xf32> to vector<8x256xf32>
    %73 = arith.addf %72, %71 : vector<8x256xf32>
    %74 = arith.negf %73 : vector<8x256xf32>
    %75 = math.exp %74 : vector<8x256xf32>
    %cst_38 = arith.constant 1.000000e+00 : f32
    %76 = vector.broadcast %cst_38 : f32 to vector<8x256xf32>
    %77 = arith.addf %76, %75 : vector<8x256xf32>
    %78 = arith.divf %76, %77 : vector<8x256xf32>
    %79 = vector.extract_strided_slice %78 {offsets = [0, 0], sizes = [8, 128], strides = [1, 1]} : vector<8x256xf32> to vector<8x128xf32>
    %80 = vector.extract_strided_slice %78 {offsets = [0, 128], sizes = [8, 128], strides = [1, 1]} : vector<8x256xf32> to vector<8x128xf32>
    %81 = vector.extract_strided_slice %69 {offsets = [0, 256], sizes = [8, 128], strides = [1, 1]} : vector<8x384xf32> to vector<8x128xf32>
    %82 = arith.mulf %80, %66 : vector<8x128xf32>
    %c0_39 = arith.constant 0 : index
    %c0_40 = arith.constant 0 : index
    %83 = vector.load %arg11[%c0_39, %c0_40] : memref<128x128xf32, #tpu.memory_space<vmem>>, vector<128x128xf32>
    %cst_41 = arith.constant dense<0.000000e+00> : vector<8x128xf32>
    %84 = tpu.matmul %82, %83, %cst_41 {dimension_numbers = #tpu.dot_dimension_numbers<[1], [0], [0], [1], [0, 0, 1, 1], [], []>} : vector<8x128xf32>, vector<128x128xf32>, vector<8x128xf32> -> vector<8x128xf32>
    %85 = arith.addf %81, %84 : vector<8x128xf32>
    %86 = arith.negf %85 : vector<8x128xf32>
    %87 = math.exp %86 : vector<8x128xf32>
    %cst_42 = arith.constant 1.000000e+00 : f32
    %88 = vector.broadcast %cst_42 : f32 to vector<8x128xf32>
    %89 = arith.addf %88, %87 : vector<8x128xf32>
    %90 = arith.divf %88, %89 : vector<8x128xf32>
    %91 = arith.subf %90, %66 : vector<8x128xf32>
    %92 = arith.mulf %79, %91 : vector<8x128xf32>
    %93 = arith.addf %66, %92 : vector<8x128xf32>
    %c3_i32 = arith.constant 3 : i32
    %94 = arith.index_cast %c3_i32 : i32 to index
    %c0_43 = arith.constant 0 : index
    %c0_44 = arith.constant 0 : index
    %95 = vector.load %arg13[%94, %c0_43, %c0_44] : memref<8x8x384xf32, #tpu.memory_space<vmem>>, vector<1x8x384xf32>
    %96 = vector.shape_cast %95 : vector<1x8x384xf32> to vector<8x384xf32>
    %c0_45 = arith.constant 0 : index
    %c0_46 = arith.constant 0 : index
    %97 = vector.load %arg10[%c0_45, %c0_46] : memref<128x256xf32, #tpu.memory_space<vmem>>, vector<128x256xf32>
    %cst_47 = arith.constant dense<0.000000e+00> : vector<8x256xf32>
    %98 = tpu.matmul %93, %97, %cst_47 {dimension_numbers = #tpu.dot_dimension_numbers<[1], [0], [0], [1], [0, 0, 1, 1], [], []>} : vector<8x128xf32>, vector<128x256xf32>, vector<8x256xf32> -> vector<8x256xf32>
    %99 = vector.extract_strided_slice %96 {offsets = [0, 0], sizes = [8, 256], strides = [1, 1]} : vector<8x384xf32> to vector<8x256xf32>
    %100 = arith.addf %99, %98 : vector<8x256xf32>
    %101 = arith.negf %100 : vector<8x256xf32>
    %102 = math.exp %101 : vector<8x256xf32>
    %cst_48 = arith.constant 1.000000e+00 : f32
    %103 = vector.broadcast %cst_48 : f32 to vector<8x256xf32>
    %104 = arith.addf %103, %102 : vector<8x256xf32>
    %105 = arith.divf %103, %104 : vector<8x256xf32>
    %106 = vector.extract_strided_slice %105 {offsets = [0, 0], sizes = [8, 128], strides = [1, 1]} : vector<8x256xf32> to vector<8x128xf32>
    %107 = vector.extract_strided_slice %105 {offsets = [0, 128], sizes = [8, 128], strides = [1, 1]} : vector<8x256xf32> to vector<8x128xf32>
    %108 = vector.extract_strided_slice %96 {offsets = [0, 256], sizes = [8, 128], strides = [1, 1]} : vector<8x384xf32> to vector<8x128xf32>
    %109 = arith.mulf %107, %93 : vector<8x128xf32>
    %c0_49 = arith.constant 0 : index
    %c0_50 = arith.constant 0 : index
    %110 = vector.load %arg11[%c0_49, %c0_50] : memref<128x128xf32, #tpu.memory_space<vmem>>, vector<128x128xf32>
    %cst_51 = arith.constant dense<0.000000e+00> : vector<8x128xf32>
    %111 = tpu.matmul %109, %110, %cst_51 {dimension_numbers = #tpu.dot_dimension_numbers<[1], [0], [0], [1], [0, 0, 1, 1], [], []>} : vector<8x128xf32>, vector<128x128xf32>, vector<8x128xf32> -> vector<8x128xf32>
    %112 = arith.addf %108, %111 : vector<8x128xf32>
    %113 = arith.negf %112 : vector<8x128xf32>
    %114 = math.exp %113 : vector<8x128xf32>
    %cst_52 = arith.constant 1.000000e+00 : f32
    %115 = vector.broadcast %cst_52 : f32 to vector<8x128xf32>
    %116 = arith.addf %115, %114 : vector<8x128xf32>
    %117 = arith.divf %115, %116 : vector<8x128xf32>
    %118 = arith.subf %117, %93 : vector<8x128xf32>
    %119 = arith.mulf %106, %118 : vector<8x128xf32>
    %120 = arith.addf %93, %119 : vector<8x128xf32>
    %c4_i32 = arith.constant 4 : i32
    %121 = arith.index_cast %c4_i32 : i32 to index
    %c0_53 = arith.constant 0 : index
    %c0_54 = arith.constant 0 : index
    %122 = vector.load %arg13[%121, %c0_53, %c0_54] : memref<8x8x384xf32, #tpu.memory_space<vmem>>, vector<1x8x384xf32>
    %123 = vector.shape_cast %122 : vector<1x8x384xf32> to vector<8x384xf32>
    %c0_55 = arith.constant 0 : index
    %c0_56 = arith.constant 0 : index
    %124 = vector.load %arg10[%c0_55, %c0_56] : memref<128x256xf32, #tpu.memory_space<vmem>>, vector<128x256xf32>
    %cst_57 = arith.constant dense<0.000000e+00> : vector<8x256xf32>
    %125 = tpu.matmul %120, %124, %cst_57 {dimension_numbers = #tpu.dot_dimension_numbers<[1], [0], [0], [1], [0, 0, 1, 1], [], []>} : vector<8x128xf32>, vector<128x256xf32>, vector<8x256xf32> -> vector<8x256xf32>
    %126 = vector.extract_strided_slice %123 {offsets = [0, 0], sizes = [8, 256], strides = [1, 1]} : vector<8x384xf32> to vector<8x256xf32>
    %127 = arith.addf %126, %125 : vector<8x256xf32>
    %128 = arith.negf %127 : vector<8x256xf32>
    %129 = math.exp %128 : vector<8x256xf32>
    %cst_58 = arith.constant 1.000000e+00 : f32
    %130 = vector.broadcast %cst_58 : f32 to vector<8x256xf32>
    %131 = arith.addf %130, %129 : vector<8x256xf32>
    %132 = arith.divf %130, %131 : vector<8x256xf32>
    %133 = vector.extract_strided_slice %132 {offsets = [0, 0], sizes = [8, 128], strides = [1, 1]} : vector<8x256xf32> to vector<8x128xf32>
    %134 = vector.extract_strided_slice %132 {offsets = [0, 128], sizes = [8, 128], strides = [1, 1]} : vector<8x256xf32> to vector<8x128xf32>
    %135 = vector.extract_strided_slice %123 {offsets = [0, 256], sizes = [8, 128], strides = [1, 1]} : vector<8x384xf32> to vector<8x128xf32>
    %136 = arith.mulf %134, %120 : vector<8x128xf32>
    %c0_59 = arith.constant 0 : index
    %c0_60 = arith.constant 0 : index
    %137 = vector.load %arg11[%c0_59, %c0_60] : memref<128x128xf32, #tpu.memory_space<vmem>>, vector<128x128xf32>
    %cst_61 = arith.constant dense<0.000000e+00> : vector<8x128xf32>
    %138 = tpu.matmul %136, %137, %cst_61 {dimension_numbers = #tpu.dot_dimension_numbers<[1], [0], [0], [1], [0, 0, 1, 1], [], []>} : vector<8x128xf32>, vector<128x128xf32>, vector<8x128xf32> -> vector<8x128xf32>
    %139 = arith.addf %135, %138 : vector<8x128xf32>
    %140 = arith.negf %139 : vector<8x128xf32>
    %141 = math.exp %140 : vector<8x128xf32>
    %cst_62 = arith.constant 1.000000e+00 : f32
    %142 = vector.broadcast %cst_62 : f32 to vector<8x128xf32>
    %143 = arith.addf %142, %141 : vector<8x128xf32>
    %144 = arith.divf %142, %143 : vector<8x128xf32>
    %145 = arith.subf %144, %120 : vector<8x128xf32>
    %146 = arith.mulf %133, %145 : vector<8x128xf32>
    %147 = arith.addf %120, %146 : vector<8x128xf32>
    %c5_i32 = arith.constant 5 : i32
    %148 = arith.index_cast %c5_i32 : i32 to index
    %c0_63 = arith.constant 0 : index
    %c0_64 = arith.constant 0 : index
    %149 = vector.load %arg13[%148, %c0_63, %c0_64] : memref<8x8x384xf32, #tpu.memory_space<vmem>>, vector<1x8x384xf32>
    %150 = vector.shape_cast %149 : vector<1x8x384xf32> to vector<8x384xf32>
    %c0_65 = arith.constant 0 : index
    %c0_66 = arith.constant 0 : index
    %151 = vector.load %arg10[%c0_65, %c0_66] : memref<128x256xf32, #tpu.memory_space<vmem>>, vector<128x256xf32>
    %cst_67 = arith.constant dense<0.000000e+00> : vector<8x256xf32>
    %152 = tpu.matmul %147, %151, %cst_67 {dimension_numbers = #tpu.dot_dimension_numbers<[1], [0], [0], [1], [0, 0, 1, 1], [], []>} : vector<8x128xf32>, vector<128x256xf32>, vector<8x256xf32> -> vector<8x256xf32>
    %153 = vector.extract_strided_slice %150 {offsets = [0, 0], sizes = [8, 256], strides = [1, 1]} : vector<8x384xf32> to vector<8x256xf32>
    %154 = arith.addf %153, %152 : vector<8x256xf32>
    %155 = arith.negf %154 : vector<8x256xf32>
    %156 = math.exp %155 : vector<8x256xf32>
    %cst_68 = arith.constant 1.000000e+00 : f32
    %157 = vector.broadcast %cst_68 : f32 to vector<8x256xf32>
    %158 = arith.addf %157, %156 : vector<8x256xf32>
    %159 = arith.divf %157, %158 : vector<8x256xf32>
    %160 = vector.extract_strided_slice %159 {offsets = [0, 0], sizes = [8, 128], strides = [1, 1]} : vector<8x256xf32> to vector<8x128xf32>
    %161 = vector.extract_strided_slice %159 {offsets = [0, 128], sizes = [8, 128], strides = [1, 1]} : vector<8x256xf32> to vector<8x128xf32>
    %162 = vector.extract_strided_slice %150 {offsets = [0, 256], sizes = [8, 128], strides = [1, 1]} : vector<8x384xf32> to vector<8x128xf32>
    %163 = arith.mulf %161, %147 : vector<8x128xf32>
    %c0_69 = arith.constant 0 : index
    %c0_70 = arith.constant 0 : index
    %164 = vector.load %arg11[%c0_69, %c0_70] : memref<128x128xf32, #tpu.memory_space<vmem>>, vector<128x128xf32>
    %cst_71 = arith.constant dense<0.000000e+00> : vector<8x128xf32>
    %165 = tpu.matmul %163, %164, %cst_71 {dimension_numbers = #tpu.dot_dimension_numbers<[1], [0], [0], [1], [0, 0, 1, 1], [], []>} : vector<8x128xf32>, vector<128x128xf32>, vector<8x128xf32> -> vector<8x128xf32>
    %166 = arith.addf %162, %165 : vector<8x128xf32>
    %167 = arith.negf %166 : vector<8x128xf32>
    %168 = math.exp %167 : vector<8x128xf32>
    %cst_72 = arith.constant 1.000000e+00 : f32
    %169 = vector.broadcast %cst_72 : f32 to vector<8x128xf32>
    %170 = arith.addf %169, %168 : vector<8x128xf32>
    %171 = arith.divf %169, %170 : vector<8x128xf32>
    %172 = arith.subf %171, %147 : vector<8x128xf32>
    %173 = arith.mulf %160, %172 : vector<8x128xf32>
    %174 = arith.addf %147, %173 : vector<8x128xf32>
    %c6_i32 = arith.constant 6 : i32
    %175 = arith.index_cast %c6_i32 : i32 to index
    %c0_73 = arith.constant 0 : index
    %c0_74 = arith.constant 0 : index
    %176 = vector.load %arg13[%175, %c0_73, %c0_74] : memref<8x8x384xf32, #tpu.memory_space<vmem>>, vector<1x8x384xf32>
    %177 = vector.shape_cast %176 : vector<1x8x384xf32> to vector<8x384xf32>
    %c0_75 = arith.constant 0 : index
    %c0_76 = arith.constant 0 : index
    %178 = vector.load %arg10[%c0_75, %c0_76] : memref<128x256xf32, #tpu.memory_space<vmem>>, vector<128x256xf32>
    %cst_77 = arith.constant dense<0.000000e+00> : vector<8x256xf32>
    %179 = tpu.matmul %174, %178, %cst_77 {dimension_numbers = #tpu.dot_dimension_numbers<[1], [0], [0], [1], [0, 0, 1, 1], [], []>} : vector<8x128xf32>, vector<128x256xf32>, vector<8x256xf32> -> vector<8x256xf32>
    %180 = vector.extract_strided_slice %177 {offsets = [0, 0], sizes = [8, 256], strides = [1, 1]} : vector<8x384xf32> to vector<8x256xf32>
    %181 = arith.addf %180, %179 : vector<8x256xf32>
    %182 = arith.negf %181 : vector<8x256xf32>
    %183 = math.exp %182 : vector<8x256xf32>
    %cst_78 = arith.constant 1.000000e+00 : f32
    %184 = vector.broadcast %cst_78 : f32 to vector<8x256xf32>
    %185 = arith.addf %184, %183 : vector<8x256xf32>
    %186 = arith.divf %184, %185 : vector<8x256xf32>
    %187 = vector.extract_strided_slice %186 {offsets = [0, 0], sizes = [8, 128], strides = [1, 1]} : vector<8x256xf32> to vector<8x128xf32>
    %188 = vector.extract_strided_slice %186 {offsets = [0, 128], sizes = [8, 128], strides = [1, 1]} : vector<8x256xf32> to vector<8x128xf32>
    %189 = vector.extract_strided_slice %177 {offsets = [0, 256], sizes = [8, 128], strides = [1, 1]} : vector<8x384xf32> to vector<8x128xf32>
    %190 = arith.mulf %188, %174 : vector<8x128xf32>
    %c0_79 = arith.constant 0 : index
    %c0_80 = arith.constant 0 : index
    %191 = vector.load %arg11[%c0_79, %c0_80] : memref<128x128xf32, #tpu.memory_space<vmem>>, vector<128x128xf32>
    %cst_81 = arith.constant dense<0.000000e+00> : vector<8x128xf32>
    %192 = tpu.matmul %190, %191, %cst_81 {dimension_numbers = #tpu.dot_dimension_numbers<[1], [0], [0], [1], [0, 0, 1, 1], [], []>} : vector<8x128xf32>, vector<128x128xf32>, vector<8x128xf32> -> vector<8x128xf32>
    %193 = arith.addf %189, %192 : vector<8x128xf32>
    %194 = arith.negf %193 : vector<8x128xf32>
    %195 = math.exp %194 : vector<8x128xf32>
    %cst_82 = arith.constant 1.000000e+00 : f32
    %196 = vector.broadcast %cst_82 : f32 to vector<8x128xf32>
    %197 = arith.addf %196, %195 : vector<8x128xf32>
    %198 = arith.divf %196, %197 : vector<8x128xf32>
    %199 = arith.subf %198, %174 : vector<8x128xf32>
    %200 = arith.mulf %187, %199 : vector<8x128xf32>
    %201 = arith.addf %174, %200 : vector<8x128xf32>
    %c7_i32 = arith.constant 7 : i32
    %202 = arith.index_cast %c7_i32 : i32 to index
    %c0_83 = arith.constant 0 : index
    %c0_84 = arith.constant 0 : index
    %203 = vector.load %arg13[%202, %c0_83, %c0_84] : memref<8x8x384xf32, #tpu.memory_space<vmem>>, vector<1x8x384xf32>
    %204 = vector.shape_cast %203 : vector<1x8x384xf32> to vector<8x384xf32>
    %c0_85 = arith.constant 0 : index
    %c0_86 = arith.constant 0 : index
    %205 = vector.load %arg10[%c0_85, %c0_86] : memref<128x256xf32, #tpu.memory_space<vmem>>, vector<128x256xf32>
    %cst_87 = arith.constant dense<0.000000e+00> : vector<8x256xf32>
    %206 = tpu.matmul %201, %205, %cst_87 {dimension_numbers = #tpu.dot_dimension_numbers<[1], [0], [0], [1], [0, 0, 1, 1], [], []>} : vector<8x128xf32>, vector<128x256xf32>, vector<8x256xf32> -> vector<8x256xf32>
    %207 = vector.extract_strided_slice %204 {offsets = [0, 0], sizes = [8, 256], strides = [1, 1]} : vector<8x384xf32> to vector<8x256xf32>
    %208 = arith.addf %207, %206 : vector<8x256xf32>
    %209 = arith.negf %208 : vector<8x256xf32>
    %210 = math.exp %209 : vector<8x256xf32>
    %cst_88 = arith.constant 1.000000e+00 : f32
    %211 = vector.broadcast %cst_88 : f32 to vector<8x256xf32>
    %212 = arith.addf %211, %210 : vector<8x256xf32>
    %213 = arith.divf %211, %212 : vector<8x256xf32>
    %214 = vector.extract_strided_slice %213 {offsets = [0, 0], sizes = [8, 128], strides = [1, 1]} : vector<8x256xf32> to vector<8x128xf32>
    %215 = vector.extract_strided_slice %213 {offsets = [0, 128], sizes = [8, 128], strides = [1, 1]} : vector<8x256xf32> to vector<8x128xf32>
    %216 = vector.extract_strided_slice %204 {offsets = [0, 256], sizes = [8, 128], strides = [1, 1]} : vector<8x384xf32> to vector<8x128xf32>
    %217 = arith.mulf %215, %201 : vector<8x128xf32>
    %c0_89 = arith.constant 0 : index
    %c0_90 = arith.constant 0 : index
    %218 = vector.load %arg11[%c0_89, %c0_90] : memref<128x128xf32, #tpu.memory_space<vmem>>, vector<128x128xf32>
    %cst_91 = arith.constant dense<0.000000e+00> : vector<8x128xf32>
    %219 = tpu.matmul %217, %218, %cst_91 {dimension_numbers = #tpu.dot_dimension_numbers<[1], [0], [0], [1], [0, 0, 1, 1], [], []>} : vector<8x128xf32>, vector<128x128xf32>, vector<8x128xf32> -> vector<8x128xf32>
    %220 = arith.addf %216, %219 : vector<8x128xf32>
    %221 = arith.negf %220 : vector<8x128xf32>
    %222 = math.exp %221 : vector<8x128xf32>
    %cst_92 = arith.constant 1.000000e+00 : f32
    %223 = vector.broadcast %cst_92 : f32 to vector<8x128xf32>
    %224 = arith.addf %223, %222 : vector<8x128xf32>
    %225 = arith.divf %223, %224 : vector<8x128xf32>
    %226 = arith.subf %225, %201 : vector<8x128xf32>
    %227 = arith.mulf %214, %226 : vector<8x128xf32>
    %228 = arith.addf %201, %227 : vector<8x128xf32>
    %c8_i32 = arith.constant 8 : i32
    %c0_93 = arith.constant 0 : index
    %c0_94 = arith.constant 0 : index
    %229 = vector.load %arg8[%c0_93, %c0_94] : memref<8x128xf32, #tpu.memory_space<vmem>>, vector<8x128xf32>
    tpu.vector_store %arg8[%c0_93, %c0_94], %228 {strides = array<i32>} : memref<8x128xf32, #tpu.memory_space<vmem>>, vector<8x128xf32>,
    return
  }
  func.func @transform_0(%arg0: i32, %arg1: i32) -> (i32, i32, i32) {
    %c0_i32 = arith.constant 0 : i32
    %c0_i32_0 = arith.constant 0 : i32
    return %arg1, %arg0, %c0_i32 : i32, i32, i32
  }
  func.func @transform_2(%arg0: i32, %arg1: i32) -> (i32, i32) {
    %c0_i32 = arith.constant 0 : i32
    %c0_i32_0 = arith.constant 0 : i32
    %c0_i32_1 = arith.constant 0 : i32
    return %c0_i32, %c0_i32_0 : i32, i32
  }
  func.func @transform_5(%arg0: i32, %arg1: i32) -> (i32, i32) {
    %c0_i32 = arith.constant 0 : i32
    %c0_i32_0 = arith.constant 0 : i32
    return %arg0, %c0_i32 : i32, i32
  }
  func.func @transform_6(%arg0: i32, %arg1: i32) -> (i32, i32) {
    %c0_i32 = arith.constant 0 : i32
    %c0_i32_0 = arith.constant 0 : i32
    return %arg0, %c0_i32 : i32, i32
  }
}

</mosaic_0001>

<llo_original>
// kernel: tpu_custom_call.1
$region0: #{tpu_custom_call.1}
  #allocation0 [shape = 'u32[]', space=smem, size = 0x4, offset = 0x4, fixed_abs, tag = 'smem constant byte address 0x4 - core index']
  #allocation1 [shape = 'u32[144,128]{1,0:T(1,128)}', space=vmem, size = 0x12000, scoped, tag = 'internal scratch']
  #allocation2 [shape = 'f32[128,384]{1,0:T(8,128)}', space=vmem, size = 0x30000, scoped, tag = 'scratch operand']
  #allocation3 [shape = 'f32[128,256]{1,0:T(8,128)}', space=vmem, size = 0x20000, scoped, tag = 'scratch operand']
  #allocation4 [shape = 'f32[128,128]{1,0:T(8,128)}', space=vmem, size = 0x10000, scoped, tag = 'scratch operand']
  #allocation5 [shape = 's32[3]{0}', space=sflag, size = 0xc, scoped, tag = 'scratch operand']
  #allocation6 [shape = 'f32[8,8,384]{2,1,0:T(8,128)}', space=vmem, size = 0x18000, scoped, tag = 'scratch operand']
  #allocation13 [shape = 's32[]', space=sflag, size = 0x4, offset = 0, fixed_abs, tag = 'sflag constant byte address 0x0 - dummy sync flag']
  #allocation14 [shape = 's32[]', space=sflag, size = 0x4, offset = 0, fixed_abs, tag = 'sflag constant byte address 0x0 - dummy sync flag']
  #allocation15 [shape = 'u32[]', space=smem, size = 0x4, offset = 0x44, fixed_abs, tag = 'smem constant byte address 0x44 - assertion arg 0']
  #allocation16 [shape = 'u32[]', space=smem, size = 0x4, offset = 0x48, fixed_abs, tag = 'smem constant byte address 0x48 - assertion arg 1']
  #allocation17 [shape = 's32[]', space=sflag, size = 0x4, offset = 0, fixed_abs, tag = 'sflag constant byte address 0x0 - dummy sync flag']
  #allocation18 [shape = 's32[]', space=sflag, size = 0x4, offset = 0, fixed_abs, tag = 'sflag constant byte address 0x0 - dummy sync flag']
  #allocation19 [shape = 's32[]', space=sflag, size = 0x4, offset = 0, fixed_abs, tag = 'sflag constant byte address 0x0 - dummy sync flag']
  #allocation20 [shape = 's32[]', space=sflag, size = 0x4, offset = 0, fixed_abs, tag = 'sflag constant byte address 0x0 - dummy sync flag']
  %s0 = inlined_call_operand.hbm [shape: f32[8,8,128], index: 0, kind: input, shape index: {}]
  %s1 = inlined_call_operand.hbm [shape: f32[128,384], index: 1, kind: input, shape index: {}]
  %s2 = inlined_call_operand.hbm [shape: f32[1,384], index: 2, kind: input, shape index: {}]
  %s3 = inlined_call_operand.hbm [shape: f32[128,256], index: 3, kind: input, shape index: {}]
  %s4 = inlined_call_operand.hbm [shape: f32[128,128], index: 4, kind: input, shape index: {}]
  %s5 = inlined_call_operand.vmem [shape: f32[8,128], index: 5, kind: input, shape index: {}]
  %s6 = inlined_call_operand.hbm [shape: f32[8,128], index: 6, kind: output, shape index: {}]
  %s7 = sld [smem:[#allocation0]]
  $region46: #{tpu_custom_call.1} parent=0
    _
  %s9 = ssub.s32 1, %s7
  %s10 = scalar_select 0, %s9, %s7
  $region1: #{tpu_custom_call.1} parent=0
    #allocation7 [shape = 'u8[32768]{0}', space=vmem, size = 0x8000, scoped, tag = 'input window, operand 0, single buffered']
    #allocation8 [shape = 's32[1]{0}', space=sflag, size = 0x4, scoped, tag = 'scoped memory for tpu_custom_call.1']
    #allocation9 [shape = 's32[1]{0}', space=sflag, size = 0x4, scoped, tag = 'scoped memory for tpu_custom_call.1']
    #allocation10 [shape = 'u8[1536]{0}', space=vmem, size = 0x800, scoped, tag = 'input window, operand 2, single buffered']
    #allocation11 [shape = 's32[1]{0}', space=sflag, size = 0x4, scoped, tag = 'scoped memory for tpu_custom_call.1']
    #allocation12 [shape = 'u8[4096]{0}', space=vmem, size = 0x1000, scoped, tag = 'output window, operand 0, single buffered']
    %11 = vsyncpa [#allocation8], 0
    %12 = vsyncpa [#allocation11], 0
    %13 = vsyncpa [#allocation9], 0
    // Predicated region
    $region2: #{tpu_custom_call.1} parent=1 // pred_check
      _
    $region3: #{tpu_custom_call.1} parent=1 // pred_check_branch
      %15 = sbr.rel (0) target = $region5
    $region4: #{tpu_custom_call.1} parent=1 // pred_region
      %s17 = ssub.s32 1024, 1024
      %18 = vsyncadd [#allocation8], %s17
      %s19 = sshll.u32 [#allocation7], 4
      %s20 = int_to_ptr.vmem [resolvable:$true] %s19
      %25 = dma.hbm_to_vmem [thread:$0]  %s0, 1024, %s20, [#allocation8], 128, 128, 8
    $region5: #{tpu_custom_call.1} parent=1 // pred_fallthru
      _
    // Predicated region
    $region6: #{tpu_custom_call.1} parent=1 // pred_check
      _
    $region7: #{tpu_custom_call.1} parent=1 // pred_check_branch
      %27 = sbr.rel (0) target = $region9
    $region8: #{tpu_custom_call.1} parent=1 // pred_region
      %s29 = ssub.s32 48, 48
      %30 = vsyncadd [#allocation11], %s29
      %s32 = sshll.u32 [#allocation10], 4
      %s33 = int_to_ptr.vmem [resolvable:$true] %s32
      %35 = dma.hbm_to_vmem [thread:$0]  %s2, 48, %s33, [#allocation11]
    $region9: #{tpu_custom_call.1} parent=1 // pred_fallthru
      _
    // Predicated region
    $region10: #{tpu_custom_call.1} parent=1 // pred_check
      _
    $region11: #{tpu_custom_call.1} parent=1 // pred_check_branch
      %37 = sbr.rel (0) target = $region13
    $region12: #{tpu_custom_call.1} parent=1 // pred_region
      _
    $region13: #{tpu_custom_call.1} parent=1 // pred_fallthru
      _
    // Predicated region
    $region14: #{tpu_custom_call.1} parent=1 // pred_check
      _
    $region15: #{tpu_custom_call.1} parent=1 // pred_check_branch
      %39 = sbr.rel (0) target = $region17
    $region16: #{tpu_custom_call.1} parent=1 // pred_region
      %40 = dma.done [#allocation8], 1024
    $region17: #{tpu_custom_call.1} parent=1 // pred_fallthru
      _
    // Predicated region
    $region18: #{tpu_custom_call.1} parent=1 // pred_check
      _
    $region19: #{tpu_custom_call.1} parent=1 // pred_check_branch
      %42 = sbr.rel (0) target = $region21
    $region20: #{tpu_custom_call.1} parent=1 // pred_region
      %43 = dma.done [#allocation11], 48
    $region21: #{tpu_custom_call.1} parent=1 // pred_fallthru
      _
    %p44 = scmp.eq.s32.totalorder 0, 0
    // Predicated region
    $region22: #{tpu_custom_call.1} parent=1 // pred_check
      %p45 = pneg %p44
    $region23: #{tpu_custom_call.1} parent=1 // pred_check_branch
      %47 = sbr.rel (%p45) target = $region25
    $region24: #{tpu_custom_call.1} parent=1 // pred_region
      // Predicated region
      $region26: #{tpu_custom_call.1} parent=24 // pred_check
        _
      $region27: #{tpu_custom_call.1} parent=24 // pred_check_branch
        %49 = sbr.rel target = $region29
      $region28: #{tpu_custom_call.1} parent=24 // pred_region
        %50 = sst [smem:[#allocation15]] [#allocation14]
        %51 = sst [smem:[#allocation16]] [#allocation13]
      $region29: #{tpu_custom_call.1} parent=24 // pred_fallthru
        _
      %53 = shalt.err (0)
      %s55 = sshll.u32 [#allocation2], 4
      %s56 = int_to_ptr.vmem [resolvable:$true] %s55
      %58 = dma.hbm_to_vmem [thread:$0]  %s1, 6144, %s56, [#allocation5]
      %s59 = scalar_lea.sflag [#allocation5], 1
      // Predicated region
      $region30: #{tpu_custom_call.1} parent=24 // pred_check
        _
      $region31: #{tpu_custom_call.1} parent=24 // pred_check_branch
        %61 = sbr.rel target = $region33
      $region32: #{tpu_custom_call.1} parent=24 // pred_region
        %62 = sst [smem:[#allocation15]] [#allocation18]
        %63 = sst [smem:[#allocation16]] [#allocation17]
      $region33: #{tpu_custom_call.1} parent=24 // pred_fallthru
        _
      %65 = shalt.err (0)
      %s67 = sshll.u32 [#allocation3], 4
      %s68 = int_to_ptr.vmem [resolvable:$true] %s67
      %70 = dma.hbm_to_vmem [thread:$0]  %s3, 4096, %s68, %s59
      %s71 = scalar_lea.sflag [#allocation5], 2
      // Predicated region
      $region34: #{tpu_custom_call.1} parent=24 // pred_check
        _
      $region35: #{tpu_custom_call.1} parent=24 // pred_check_branch
        %73 = sbr.rel target = $region37
      $region36: #{tpu_custom_call.1} parent=24 // pred_region
        %74 = sst [smem:[#allocation15]] [#allocation20]
        %75 = sst [smem:[#allocation16]] [#allocation19]
      $region37: #{tpu_custom_call.1} parent=24 // pred_fallthru
        _
      %77 = shalt.err (0)
      %s79 = sshll.u32 [#allocation4], 4
      %s80 = int_to_ptr.vmem [resolvable:$true] %s79
      %82 = dma.hbm_to_vmem [thread:$0]  %s4, 2048, %s80, %s71
      %s83 = smul.u32 8, 16
      %s84 = smul.u32 %s83, 3
      %s85 = sshll.u32 %s84, 4
      %86 = dma.done [#allocation5], %s85
      %s87 = smul.u32 %s83, 2
      %s88 = sshll.u32 %s87, 4
      %89 = dma.done %s59, %s88
      %s90 = smul.u32 128, 1
      %s91 = sshll.u32 %s90, 4
      %92 = dma.done %s71, %s91
      %v93 = vld [vmem:[%s5] sm:$0xff]
      %94 = vst [vmem:[#allocation12] sm:$0xff] %v93
    $region25: #{tpu_custom_call.1} parent=1 // pred_fallthru
      _
    %v95 = vld [vmem:[#allocation12] sm:$0xff]
    %v96 = vld [vmem:[#allocation7] sm:$0xff]
    %v97 = vld [vmem:[#allocation7 + $0x8] sm:$0xff]
    %v98 = vld [vmem:[#allocation7 + $0x10] sm:$0xff]
    %v99 = vld [vmem:[#allocation7 + $0x18] sm:$0xff]
    %v100 = vld [vmem:[#allocation7 + $0x20] sm:$0xff]
    %v101 = vld [vmem:[#allocation7 + $0x28] sm:$0xff]
    %v102 = vld [vmem:[#allocation7 + $0x30] sm:$0xff]
    %v103 = vld [vmem:[#allocation7 + $0x38] sm:$0xff]
    %v104 = vld [vmem:[#allocation2] sm:$0xff]
    %v105 = vld [vmem:[#allocation2 + $0x8] sm:$0xff]
    %v106 = vld [vmem:[#allocation2 + $0x10] sm:$0xff]
    %v107 = vld [vmem:[#allocation2 + $0x18] sm:$0xff]
    %v108 = vld [vmem:[#allocation2 + $0x20] sm:$0xff]
    %v109 = vld [vmem:[#allocation2 + $0x28] sm:$0xff]
    %v110 = vld [vmem:[#allocation2 + $0x30] sm:$0xff]
    %v111 = vld [vmem:[#allocation2 + $0x38] sm:$0xff]
    %v112 = vld [vmem:[#allocation2 + $0x40] sm:$0xff]
    %v113 = vld [vmem:[#allocation2 + $0x48] sm:$0xff]
    %v114 = vld [vmem:[#allocation2 + $0x50] sm:$0xff]
    %v115 = vld [vmem:[#allocation2 + $0x58] sm:$0xff]
    %v116 = vld [vmem:[#allocation2 + $0x60] sm:$0xff]
    %v117 = vld [vmem:[#allocation2 + $0x68] sm:$0xff]
    %v118 = vld [vmem:[#allocation2 + $0x70] sm:$0xff]
    %v119 = vld [vmem:[#allocation2 + $0x78] sm:$0xff]
    %v120 = vld [vmem:[#allocation2 + $0x80] sm:$0xff]
    %v121 = vld [vmem:[#allocation2 + $0x88] sm:$0xff]
    %v122 = vld [vmem:[#allocation2 + $0x90] sm:$0xff]
    %v123 = vld [vmem:[#allocation2 + $0x98] sm:$0xff]
    %v124 = vld [vmem:[#allocation2 + $0xa0] sm:$0xff]
    %v125 = vld [vmem:[#allocation2 + $0xa8] sm:$0xff]
    %v126 = vld [vmem:[#allocation2 + $0xb0] sm:$0xff]
    %v127 = vld [vmem:[#allocation2 + $0xb8] sm:$0xff]
    %v128 = vld [vmem:[#allocation2 + $0xc0] sm:$0xff]
    %v129 = vld [vmem:[#allocation2 + $0xc8] sm:$0xff]
    %v130 = vld [vmem:[#allocation2 + $0xd0] sm:$0xff]
    %v131 = vld [vmem:[#allocation2 + $0xd8] sm:$0xff]
    %v132 = vld [vmem:[#allocation2 + $0xe0] sm:$0xff]
    %v133 = vld [vmem:[#allocation2 + $0xe8] sm:$0xff]
    %v134 = vld [vmem:[#allocation2 + $0xf0] sm:$0xff]
    %v135 = vld [vmem:[#allocation2 + $0xf8] sm:$0xff]
    %v136 = vld [vmem:[#allocation2 + $0x100] sm:$0xff]
    %v137 = vld [vmem:[#allocation2 + $0x108] sm:$0xff]
    %v138 = vld [vmem:[#allocation2 + $0x110] sm:$0xff]
    %v139 = vld [vmem:[#allocation2 + $0x118] sm:$0xff]
    %v140 = vld [vmem:[#allocation2 + $0x120] sm:$0xff]
    %v141 = vld [vmem:[#allocation2 + $0x128] sm:$0xff]
    %v142 = vld [vmem:[#allocation2 + $0x130] sm:$0xff]
    %v143 = vld [vmem:[#allocation2 + $0x138] sm:$0xff]
    %v144 = vld [vmem:[#allocation2 + $0x140] sm:$0xff]
    %v145 = vld [vmem:[#allocation2 + $0x148] sm:$0xff]
    %v146 = vld [vmem:[#allocation2 + $0x150] sm:$0xff]
    %v147 = vld [vmem:[#allocation2 + $0x158] sm:$0xff]
    %v148 = vld [vmem:[#allocation2 + $0x160] sm:$0xff]
    %v149 = vld [vmem:[#allocation2 + $0x168] sm:$0xff]
    %v150 = vld [vmem:[#allocation2 + $0x170] sm:$0xff]
    %v151 = vld [vmem:[#allocation2 + $0x178] sm:$0xff]
    %v152 = vld [vmem:[#allocation10] sm:$0x7]
    %v154 = vlaneseq
    %v155 = vshrl.u32 %v154, 7
    %v156 = vsub.s32 0, %v155
    %v157 = vrot.slane %v152, %v156
    %v158 = vlaneseq
    %v159 = vshrl.u32 %v158, 7
    %v160 = vsub.s32 1, %v159
    %v161 = vrot.slane %v152, %v160
    %v162 = vlaneseq
    %v163 = vshrl.u32 %v162, 7
    %v164 = vsub.s32 2, %v163
    %v165 = vrot.slane %v152, %v164
    %169 = vmatprep.subr.mxu0 %v150
    %170 = vmatpush1.msra.mxu0 %v149
    %171 = vmatprep.subr.mxu0 %v147
    %172 = vmatpush1.msra.mxu0 %v146
    %173 = vmatprep.subr.mxu0 %v144
    %174 = vmatpush1.msra.mxu0 %v143
    %175 = vmatprep.subr.mxu0 %v141
    %176 = vmatpush1.msra.mxu0 %v140
    %177 = vmatprep.subr.mxu0 %v138
    %178 = vmatpush1.msra.mxu0 %v137
    %179 = vmatprep.subr.mxu0 %v135
    %180 = vmatpush1.msra.mxu0 %v134
    %181 = vmatprep.subr.mxu0 %v132
    %182 = vmatpush1.msra.mxu0 %v131
    %183 = vmatprep.subr.mxu0 %v129
    %184 = vmatpush1.msra.mxu0 %v128
    %185 = vmatprep.subr.mxu0 %v126
    %186 = vmatpush1.msra.mxu0 %v125
    %187 = vmatprep.subr.mxu0 %v123
    %188 = vmatpush1.msra.mxu0 %v122
    %189 = vmatprep.subr.mxu0 %v120
    %190 = vmatpush1.msra.mxu0 %v119
    %191 = vmatprep.subr.mxu0 %v117
    %192 = vmatpush1.msra.mxu0 %v116
    %193 = vmatprep.subr.mxu0 %v114
    %194 = vmatpush1.msra.mxu0 %v113
    %195 = vmatprep.subr.mxu0 %v111
    %196 = vmatpush1.msra.mxu0 %v110
    %197 = vmatprep.subr.mxu0 %v108
    %198 = vmatpush1.msra.mxu0 %v107
    %199 = vmatprep.subr.mxu0 %v105
    %200 = vmatpush1.msra.mxu0 %v104
    %201 = vmatprep.subr.mxu0 0.0
    %202 = vmatpush2.msra.mxu0 0.0
    %203 = vmatprep.subr.mxu0 0.0
    %204 = vmatpush2.msra.mxu0 0.0
    %205 = vmatprep.subr.mxu0 0.0
    %206 = vmatpush2.msra.mxu0 0.0
    %207 = vmatprep.subr.mxu0 0.0
    %208 = vmatpush2.msra.mxu0 0.0
    %209 = vmatprep.subr.mxu0 0.0
    %210 = vmatpush2.msra.mxu0 0.0
    %211 = vmatprep.subr.mxu0 0.0
    %212 = vmatpush2.msra.mxu0 0.0
    %213 = vmatprep.subr.mxu0 0.0
    %214 = vmatpush2.msra.mxu0 0.0
    %215 = vmatprep.subr.mxu0 0.0
    %216 = vmatpush2.msra.mxu0 0.0
    %217 = vmatprep.subr.mxu0 0.0
    %218 = vmatpush2.msra.mxu0 0.0
    %219 = vmatprep.subr.mxu0 0.0
    %220 = vmatpush2.msra.mxu0 0.0
    %221 = vmatprep.subr.mxu0 0.0
    %222 = vmatpush2.msra.mxu0 0.0
    %223 = vmatprep.subr.mxu0 0.0
    %224 = vmatpush2.msra.mxu0 0.0
    %225 = vmatprep.subr.mxu0 0.0
    %226 = vmatpush2.msra.mxu0 0.0
    %227 = vmatprep.subr.mxu0 0.0
    %228 = vmatpush2.msra.mxu0 0.0
    %229 = vmatprep.subr.mxu0 0.0
    %230 = vmatpush2.msra.mxu0 0.0
    %231 = vmatprep.subr.mxu0 0.0
    %232 = vmatpush2.msra.mxu0 0.0
    %233 = vmatprep.mubr.f32.mxu0 0.0
    %234 = vmatmul.mubr.f32.gmra.mxu0 %v96
    %v235 = vpop.f32.mrf.mxu0
    %v236 = vadd.f32 %v157, %v235
    %v237 = vpop.f32.mrf.mxu0
    %v238 = vadd.f32 %v161, %v237
    %239 = vmatprep.mubr.f32.mxu0 0.0
    %240 = vmatmul.mubr.f32.gmra.mxu0 %v97
    %v241 = vpop.f32.mrf.mxu0
    %v242 = vadd.f32 %v157, %v241
    %v243 = vpop.f32.mrf.mxu0
    %v244 = vadd.f32 %v161, %v243
    %245 = vmatprep.mubr.f32.mxu0 0.0
    %246 = vmatmul.mubr.f32.gmra.mxu0 %v98
    %v247 = vpop.f32.mrf.mxu0
    %v248 = vadd.f32 %v157, %v247
    %v249 = vpop.f32.mrf.mxu0
    %v250 = vadd.f32 %v161, %v249
    %251 = vmatprep.mubr.f32.mxu0 0.0
    %252 = vmatmul.mubr.f32.gmra.mxu0 %v99
    %v253 = vpop.f32.mrf.mxu0
    %v254 = vadd.f32 %v157, %v253
    %v255 = vpop.f32.mrf.mxu0
    %v256 = vadd.f32 %v161, %v255
    %257 = vmatprep.mubr.f32.mxu0 0.0
    %258 = vmatmul.mubr.f32.gmra.mxu0 %v100
    %v259 = vpop.f32.mrf.mxu0
    %v260 = vadd.f32 %v157, %v259
    %v261 = vpop.f32.mrf.mxu0
    %v262 = vadd.f32 %v161, %v261
    %263 = vmatprep.mubr.f32.mxu0 0.0
    %264 = vmatmul.mubr.f32.gmra.mxu0 %v101
    %v265 = vpop.f32.mrf.mxu0
    %v266 = vadd.f32 %v157, %v265
    %v267 = vpop.f32.mrf.mxu0
    %v268 = vadd.f32 %v161, %v267
    %269 = vmatprep.mubr.f32.mxu0 0.0
    %270 = vmatmul.mubr.f32.gmra.mxu0 %v102
    %v271 = vpop.f32.mrf.mxu0
    %v272 = vadd.f32 %v157, %v271
    %v273 = vpop.f32.mrf.mxu0
    %v274 = vadd.f32 %v161, %v273
    %275 = vmatprep.mubr.f32.mxu0 0.0
    %276 = vmatmul.mubr.f32.gmra.mxu0 %v103
    %v277 = vpop.f32.mrf.mxu0
    %v278 = vadd.f32 %v157, %v277
    %v279 = vpop.f32.mrf.mxu0
    %v280 = vadd.f32 %v161, %v279
    %281 = vdwg.mxu0
    %282 = vmatprep.subr.mxu0 0.0
    %283 = vmatpush1.msra.mxu0 %v151
    %284 = vmatprep.subr.mxu0 0.0
    %285 = vmatpush1.msra.mxu0 %v148
    %286 = vmatprep.subr.mxu0 0.0
    %287 = vmatpush1.msra.mxu0 %v145
    %288 = vmatprep.subr.mxu0 0.0
    %289 = vmatpush1.msra.mxu0 %v142
    %290 = vmatprep.subr.mxu0 0.0
    %291 = vmatpush1.msra.mxu0 %v139
    %292 = vmatprep.subr.mxu0 0.0
    %293 = vmatpush1.msra.mxu0 %v136
    %294 = vmatprep.subr.mxu0 0.0
    %295 = vmatpush1.msra.mxu0 %v133
    %296 = vmatprep.subr.mxu0 0.0
    %297 = vmatpush1.msra.mxu0 %v130
    %298 = vmatprep.subr.mxu0 0.0
    %299 = vmatpush1.msra.mxu0 %v127
    %300 = vmatprep.subr.mxu0 0.0
    %301 = vmatpush1.msra.mxu0 %v124
    %302 = vmatprep.subr.mxu0 0.0
    %303 = vmatpush1.msra.mxu0 %v121
    %304 = vmatprep.subr.mxu0 0.0
    %305 = vmatpush1.msra.mxu0 %v118
    %306 = vmatprep.subr.mxu0 0.0
    %307 = vmatpush1.msra.mxu0 %v115
    %308 = vmatprep.subr.mxu0 0.0
    %309 = vmatpush1.msra.mxu0 %v112
    %310 = vmatprep.subr.mxu0 0.0
    %311 = vmatpush1.msra.mxu0 %v109
    %312 = vmatprep.subr.mxu0 0.0
    %313 = vmatpush1.msra.mxu0 %v106
    %314 = vmatprep.subr.mxu0 0.0
    %315 = vmatpush2.msra.mxu0 0.0
    %316 = vmatprep.subr.mxu0 0.0
    %317 = vmatpush2.msra.mxu0 0.0
    %318 = vmatprep.subr.mxu0 0.0
    %319 = vmatpush2.msra.mxu0 0.0
    %320 = vmatprep.subr.mxu0 0.0
    %321 = vmatpush2.msra.mxu0 0.0
    %322 = vmatprep.subr.mxu0 0.0
    %323 = vmatpush2.msra.mxu0 0.0
    %324 = vmatprep.subr.mxu0 0.0
    %325 = vmatpush2.msra.mxu0 0.0
    %326 = vmatprep.subr.mxu0 0.0
    %327 = vmatpush2.msra.mxu0 0.0
    %328 = vmatprep.subr.mxu0 0.0
    %329 = vmatpush2.msra.mxu0 0.0
    %330 = vmatprep.subr.mxu0 0.0
    %331 = vmatpush2.msra.mxu0 0.0
    %332 = vmatprep.subr.mxu0 0.0
    %333 = vmatpush2.msra.mxu0 0.0
    %334 = vmatprep.subr.mxu0 0.0
    %335 = vmatpush2.msra.mxu0 0.0
    %336 = vmatprep.subr.mxu0 0.0
    %337 = vmatpush2.msra.mxu0 0.0
    %338 = vmatprep.subr.mxu0 0.0
    %339 = vmatpush2.msra.mxu0 0.0
    %340 = vmatprep.subr.mxu0 0.0
    %341 = vmatpush2.msra.mxu0 0.0
    %342 = vmatprep.subr.mxu0 0.0
    %343 = vmatpush2.msra.mxu0 0.0
    %344 = vmatprep.subr.mxu0 0.0
    %345 = vmatpush2.msra.mxu0 0.0
    %346 = vmatprep.mubr.f32.mxu0 0.0
    %347 = vmatmul.mubr.f32.gmra.mxu0 %v96
    %v348 = vpop.f32.mrf.mxu0
    %v349 = vadd.f32 %v165, %v348
    %v350 = vpop.f32.mrf.mxu0
    %351 = vmatprep.mubr.f32.mxu0 0.0
    %352 = vmatmul.mubr.f32.gmra.mxu0 %v97
    %v353 = vpop.f32.mrf.mxu0
    %v354 = vadd.f32 %v165, %v353
    %v355 = vpop.f32.mrf.mxu0
    %356 = vmatprep.mubr.f32.mxu0 0.0
    %357 = vmatmul.mubr.f32.gmra.mxu0 %v98
    %v358 = vpop.f32.mrf.mxu0
    %v359 = vadd.f32 %v165, %v358
    %v360 = vpop.f32.mrf.mxu0
    %361 = vmatprep.mubr.f32.mxu0 0.0
    %362 = vmatmul.mubr.f32.gmra.mxu0 %v99
    %v363 = vpop.f32.mrf.mxu0
    %v364 = vadd.f32 %v165, %v363
    %v365 = vpop.f32.mrf.mxu0
    %366 = vmatprep.mubr.f32.mxu0 0.0
    %367 = vmatmul.mubr.f32.gmra.mxu0 %v100
    %v368 = vpop.f32.mrf.mxu0
    %v369 = vadd.f32 %v165, %v368
    %v370 = vpop.f32.mrf.mxu0
    %371 = vmatprep.mubr.f32.mxu0 0.0
    %372 = vmatmul.mubr.f32.gmra.mxu0 %v101
    %v373 = vpop.f32.mrf.mxu0
    %v374 = vadd.f32 %v165, %v373
    %v375 = vpop.f32.mrf.mxu0
    %376 = vmatprep.mubr.f32.mxu0 0.0
    %377 = vmatmul.mubr.f32.gmra.mxu0 %v102
    %v378 = vpop.f32.mrf.mxu0
    %v379 = vadd.f32 %v165, %v378
    %v380 = vpop.f32.mrf.mxu0
    %381 = vmatprep.mubr.f32.mxu0 0.0
    %382 = vmatmul.mubr.f32.gmra.mxu0 %v103
    %v383 = vpop.f32.mrf.mxu0
    %v384 = vadd.f32 %v165, %v383
    %v385 = vpop.f32.mrf.mxu0
    %386 = vdwg.mxu0
    %387 = vst [vmem:[#allocation6] sm:$0xff] %v236
    %388 = vst [vmem:[#allocation6 + $0x8] sm:$0xff] %v238
    %389 = vst [vmem:[#allocation6 + $0x10] sm:$0xff] %v349
    %390 = vst [vmem:[#allocation6 + $0x18] sm:$0xff] %v242
    %391 = vst [vmem:[#allocation6 + $0x20] sm:$0xff] %v244
    %392 = vst [vmem:[#allocation6 + $0x28] sm:$0xff] %v354
    %393 = vst [vmem:[#allocation6 + $0x30] sm:$0xff] %v248
    %394 = vst [vmem:[#allocation6 + $0x38] sm:$0xff] %v250
    %395 = vst [vmem:[#allocation6 + $0x40] sm:$0xff] %v359
    %396 = vst [vmem:[#allocation6 + $0x48] sm:$0xff] %v254
    %397 = vst [vmem:[#allocation6 + $0x50] sm:$0xff] %v256
    %398 = vst [vmem:[#allocation6 + $0x58] sm:$0xff] %v364
    %399 = vst [vmem:[#allocation6 + $0x60] sm:$0xff] %v260
    %400 = vst [vmem:[#allocation6 + $0x68] sm:$0xff] %v262
    %401 = vst [vmem:[#allocation6 + $0x70] sm:$0xff] %v369
    %402 = vst [vmem:[#allocation6 + $0x78] sm:$0xff] %v266
    %403 = vst [vmem:[#allocation6 + $0x80] sm:$0xff] %v268
    %404 = vst [vmem:[#allocation6 + $0x88] sm:$0xff] %v374
    %405 = vst [vmem:[#allocation6 + $0x90] sm:$0xff] %v272
    %406 = vst [vmem:[#allocation6 + $0x98] sm:$0xff] %v274
    %407 = vst [vmem:[#allocation6 + $0xa0] sm:$0xff] %v379
    %408 = vst [vmem:[#allocation6 + $0xa8] sm:$0xff] %v278
    %409 = vst [vmem:[#allocation6 + $0xb0] sm:$0xff] %v280
    %410 = vst [vmem:[#allocation6 + $0xb8] sm:$0xff] %v384
    %v411 = vld [vmem:[#allocation6] sm:$0xff]
    %v412 = vld [vmem:[#allocation6 + $0x8] sm:$0xff]
    %v413 = vld [vmem:[#allocation6 + $0x10] sm:$0xff]
    %v414 = vld [vmem:[#allocation3] sm:$0xff]
    %v415 = vld [vmem:[#allocation3 + $0x8] sm:$0xff]
    %v416 = vld [vmem:[#allocation3 + $0x10] sm:$0xff]
    %v417 = vld [vmem:[#allocation3 + $0x18] sm:$0xff]
    %v418 = vld [vmem:[#allocation3 + $0x20] sm:$0xff]
    %v419 = vld [vmem:[#allocation3 + $0x28] sm:$0xff]
    %v420 = vld [vmem:[#allocation3 + $0x30] sm:$0xff]
    %v421 = vld [vmem:[#allocation3 + $0x38] sm:$0xff]
    %v422 = vld [vmem:[#allocation3 + $0x40] sm:$0xff]
    %v423 = vld [vmem:[#allocation3 + $0x48] sm:$0xff]
    %v424 = vld [vmem:[#allocation3 + $0x50] sm:$0xff]
    %v425 = vld [vmem:[#allocation3 + $0x58] sm:$0xff]
    %v426 = vld [vmem:[#allocation3 + $0x60] sm:$0xff]
    %v427 = vld [vmem:[#allocation3 + $0x68] sm:$0xff]
    %v428 = vld [vmem:[#allocation3 + $0x70] sm:$0xff]
    %v429 = vld [vmem:[#allocation3 + $0x78] sm:$0xff]
    %v430 = vld [vmem:[#allocation3 + $0x80] sm:$0xff]
    %v431 = vld [vmem:[#allocation3 + $0x88] sm:$0xff]
    %v432 = vld [vmem:[#allocation3 + $0x90] sm:$0xff]
    %v433 = vld [vmem:[#allocation3 + $0x98] sm:$0xff]
    %v434 = vld [vmem:[#allocation3 + $0xa0] sm:$0xff]
    %v435 = vld [vmem:[#allocation3 + $0xa8] sm:$0xff]
    %v436 = vld [vmem:[#allocation3 + $0xb0] sm:$0xff]
    %v437 = vld [vmem:[#allocation3 + $0xb8] sm:$0xff]
    %v438 = vld [vmem:[#allocation3 + $0xc0] sm:$0xff]
    %v439 = vld [vmem:[#allocation3 + $0xc8] sm:$0xff]
    %v440 = vld [vmem:[#allocation3 + $0xd0] sm:$0xff]
    %v441 = vld [vmem:[#allocation3 + $0xd8] sm:$0xff]
    %v442 = vld [vmem:[#allocation3 + $0xe0] sm:$0xff]
    %v443 = vld [vmem:[#allocation3 + $0xe8] sm:$0xff]
    %v444 = vld [vmem:[#allocation3 + $0xf0] sm:$0xff]
    %v445 = vld [vmem:[#allocation3 + $0xf8] sm:$0xff]
    %446 = vmatprep.subr.mxu0 %v445
    %447 = vmatpush1.msra.mxu0 %v444
    %448 = vmatprep.subr.mxu0 %v443
    %449 = vmatpush1.msra.mxu0 %v442
    %450 = vmatprep.subr.mxu0 %v441
    %451 = vmatpush1.msra.mxu0 %v440
    %452 = vmatprep.subr.mxu0 %v439
    %453 = vmatpush1.msra.mxu0 %v438
    %454 = vmatprep.subr.mxu0 %v437
    %455 = vmatpush1.msra.mxu0 %v436
    %456 = vmatprep.subr.mxu0 %v435
    %457 = vmatpush1.msra.mxu0 %v434
    %458 = vmatprep.subr.mxu0 %v433
    %459 = vmatpush1.msra.mxu0 %v432
    %460 = vmatprep.subr.mxu0 %v431
    %461 = vmatpush1.msra.mxu0 %v430
    %462 = vmatprep.subr.mxu0 %v429
    %463 = vmatpush1.msra.mxu0 %v428
    %464 = vmatprep.subr.mxu0 %v427
    %465 = vmatpush1.msra.mxu0 %v426
    %466 = vmatprep.subr.mxu0 %v425
    %467 = vmatpush1.msra.mxu0 %v424
    %468 = vmatprep.subr.mxu0 %v423
    %469 = vmatpush1.msra.mxu0 %v422
    %470 = vmatprep.subr.mxu0 %v421
    %471 = vmatpush1.msra.mxu0 %v420
    %472 = vmatprep.subr.mxu0 %v419
    %473 = vmatpush1.msra.mxu0 %v418
    %474 = vmatprep.subr.mxu0 %v417
    %475 = vmatpush1.msra.mxu0 %v416
    %476 = vmatprep.subr.mxu0 %v415
    %477 = vmatpush1.msra.mxu0 %v414
    %478 = vmatprep.subr.mxu0 0.0
    %479 = vmatpush2.msra.mxu0 0.0
    %480 = vmatprep.subr.mxu0 0.0
    %481 = vmatpush2.msra.mxu0 0.0
    %482 = vmatprep.subr.mxu0 0.0
    %483 = vmatpush2.msra.mxu0 0.0
    %484 = vmatprep.subr.mxu0 0.0
    %485 = vmatpush2.msra.mxu0 0.0
    %486 = vmatprep.subr.mxu0 0.0
    %487 = vmatpush2.msra.mxu0 0.0
    %488 = vmatprep.subr.mxu0 0.0
    %489 = vmatpush2.msra.mxu0 0.0
    %490 = vmatprep.subr.mxu0 0.0
    %491 = vmatpush2.msra.mxu0 0.0
    %492 = vmatprep.subr.mxu0 0.0
    %493 = vmatpush2.msra.mxu0 0.0
    %494 = vmatprep.subr.mxu0 0.0
    %495 = vmatpush2.msra.mxu0 0.0
    %496 = vmatprep.subr.mxu0 0.0
    %497 = vmatpush2.msra.mxu0 0.0
    %498 = vmatprep.subr.mxu0 0.0
    %499 = vmatpush2.msra.mxu0 0.0
    %500 = vmatprep.subr.mxu0 0.0
    %501 = vmatpush2.msra.mxu0 0.0
    %502 = vmatprep.subr.mxu0 0.0
    %503 = vmatpush2.msra.mxu0 0.0
    %504 = vmatprep.subr.mxu0 0.0
    %505 = vmatpush2.msra.mxu0 0.0
    %506 = vmatprep.subr.mxu0 0.0
    %507 = vmatpush2.msra.mxu0 0.0
    %508 = vmatprep.subr.mxu0 0.0
    %509 = vmatpush2.msra.mxu0 0.0
    %510 = vmatprep.mubr.f32.mxu0 0.0
    %511 = vmatmul.mubr.f32.gmra.mxu0 %v95
    %v512 = vpop.f32.mrf.mxu0
    %v513 = vadd.f32 0.0, %v512
    %v514 = vpop.f32.mrf.mxu0
    %v515 = vadd.f32 0.0, %v514
    %516 = vdwg.mxu0
    %v517 = vadd.f32 %v411, %v513
    %v518 = vadd.f32 %v412, %v515
    %v519 = vxor.u32 %v517, 2147483648
    %v520 = vxor.u32 %v518, 2147483648
    %v521 = vmul.f32 %v519, 1.442695
    %v522 = vpow.pop %v521
    %v523 = vmul.f32 %v520, 1.442695
    %v524 = vpow.pop %v523
    %v525 = vadd.f32 %v522, 1.0
    %v526 = vadd.f32 %v524, 1.0
    %v527 = vrcp.pop %v525
    %v528 = vmul.f32 1.0, %v527
    %v529 = vrcp.pop %v526
    %v530 = vmul.f32 1.0, %v529
    %v531 = vmul.f32 %v530, %v95
    %v532 = vld [vmem:[#allocation4] sm:$0xff]
    %v533 = vld [vmem:[#allocation4 + $0x8] sm:$0xff]
    %v534 = vld [vmem:[#allocation4 + $0x10] sm:$0xff]
    %v535 = vld [vmem:[#allocation4 + $0x18] sm:$0xff]
    %v536 = vld [vmem:[#allocation4 + $0x20] sm:$0xff]
    %v537 = vld [vmem:[#allocation4 + $0x28] sm:$0xff]
    %v538 = vld [vmem:[#allocation4 + $0x30] sm:$0xff]
    %v539 = vld [vmem:[#allocation4 + $0x38] sm:$0xff]
    %v540 = vld [vmem:[#allocation4 + $0x40] sm:$0xff]
    %v541 = vld [vmem:[#allocation4 + $0x48] sm:$0xff]
    %v542 = vld [vmem:[#allocation4 + $0x50] sm:$0xff]
    %v543 = vld [vmem:[#allocation4 + $0x58] sm:$0xff]
    %v544 = vld [vmem:[#allocation4 + $0x60] sm:$0xff]
    %v545 = vld [vmem:[#allocation4 + $0x68] sm:$0xff]
    %v546 = vld [vmem:[#allocation4 + $0x70] sm:$0xff]
    %v547 = vld [vmem:[#allocation4 + $0x78] sm:$0xff]
    %548 = vmatprep.subr.mxu0 0.0
    %549 = vmatpush1.msra.mxu0 %v547
    %550 = vmatprep.subr.mxu0 0.0
    %551 = vmatpush1.msra.mxu0 %v546
    %552 = vmatprep.subr.mxu0 0.0
    %553 = vmatpush1.msra.mxu0 %v545
    %554 = vmatprep.subr.mxu0 0.0
    %555 = vmatpush1.msra.mxu0 %v544
    %556 = vmatprep.subr.mxu0 0.0
    %557 = vmatpush1.msra.mxu0 %v543
    %558 = vmatprep.subr.mxu0 0.0
    %559 = vmatpush1.msra.mxu0 %v542
    %560 = vmatprep.subr.mxu0 0.0
    %561 = vmatpush1.msra.mxu0 %v541
    %562 = vmatprep.subr.mxu0 0.0
    %563 = vmatpush1.msra.mxu0 %v540
    %564 = vmatprep.subr.mxu0 0.0
    %565 = vmatpush1.msra.mxu0 %v539
    %566 = vmatprep.subr.mxu0 0.0
    %567 = vmatpush1.msra.mxu0 %v538
    %568 = vmatprep.subr.mxu0 0.0
    %569 = vmatpush1.msra.mxu0 %v537
    %570 = vmatprep.subr.mxu0 0.0
    %571 = vmatpush1.msra.mxu0 %v536
    %572 = vmatprep.subr.mxu0 0.0
    %573 = vmatpush1.msra.mxu0 %v535
    %574 = vmatprep.subr.mxu0 0.0
    %575 = vmatpush1.msra.mxu0 %v534
    %576 = vmatprep.subr.mxu0 0.0
    %577 = vmatpush1.msra.mxu0 %v533
    %578 = vmatprep.subr.mxu0 0.0
    %579 = vmatpush1.msra.mxu0 %v532
    %580 = vmatprep.subr.mxu0 0.0
    %581 = vmatpush2.msra.mxu0 0.0
    %582 = vmatprep.subr.mxu0 0.0
    %583 = vmatpush2.msra.mxu0 0.0
    %584 = vmatprep.subr.mxu0 0.0
    %585 = vmatpush2.msra.mxu0 0.0
    %586 = vmatprep.subr.mxu0 0.0
    %587 = vmatpush2.msra.mxu0 0.0
    %588 = vmatprep.subr.mxu0 0.0
    %589 = vmatpush2.msra.mxu0 0.0
    %590 = vmatprep.subr.mxu0 0.0
    %591 = vmatpush2.msra.mxu0 0.0
    %592 = vmatprep.subr.mxu0 0.0
    %593 = vmatpush2.msra.mxu0 0.0
    %594 = vmatprep.subr.mxu0 0.0
    %595 = vmatpush2.msra.mxu0 0.0
    %596 = vmatprep.subr.mxu0 0.0
    %597 = vmatpush2.msra.mxu0 0.0
    %598 = vmatprep.subr.mxu0 0.0
    %599 = vmatpush2.msra.mxu0 0.0
    %600 = vmatprep.subr.mxu0 0.0
    %601 = vmatpush2.msra.mxu0 0.0
    %602 = vmatprep.subr.mxu0 0.0
    %603 = vmatpush2.msra.mxu0 0.0
    %604 = vmatprep.subr.mxu0 0.0
    %605 = vmatpush2.msra.mxu0 0.0
    %606 = vmatprep.subr.mxu0 0.0
    %607 = vmatpush2.msra.mxu0 0.0
    %608 = vmatprep.subr.mxu0 0.0
    %609 = vmatpush2.msra.mxu0 0.0
    %610 = vmatprep.subr.mxu0 0.0
    %611 = vmatpush2.msra.mxu0 0.0
    %612 = vmatprep.mubr.f32.mxu0 0.0
    %613 = vmatmul.mubr.f32.gmra.mxu0 %v531
    %v614 = vpop.f32.mrf.mxu0
    %v615 = vadd.f32 0.0, %v614
    %v616 = vpop.f32.mrf.mxu0
    %617 = vdwg.mxu0
    %v618 = vadd.f32 %v413, %v615
    %v619 = vxor.u32 %v618, 2147483648
    %v620 = vmul.f32 %v619, 1.442695
    %v621 = vpow.pop %v620
    %v622 = vadd.f32 %v621, 1.0
    %v623 = vrcp.pop %v622
    %v624 = vmul.f32 1.0, %v623
    %v625 = vsub.f32 %v624, %v95
    %v626 = vmul.f32 %v528, %v625
    %v627 = vadd.f32 %v95, %v626
    %s628 = scalar_lea.vmem [#allocation6], 24
    %v629 = vld [vmem:[%s628] sm:$0xff]
    %v630 = vld [vmem:[%s628 + $0x8] sm:$0xff]
    %v631 = vld [vmem:[%s628 + $0x10] sm:$0xff]
    %632 = vmatprep.subr.mxu0 %v445
    %633 = vmatpush1.msra.mxu0 %v444
    %634 = vmatprep.subr.mxu0 %v443
    %635 = vmatpush1.msra.mxu0 %v442
    %636 = vmatprep.subr.mxu0 %v441
    %637 = vmatpush1.msra.mxu0 %v440
    %638 = vmatprep.subr.mxu0 %v439
    %639 = vmatpush1.msra.mxu0 %v438
    %640 = vmatprep.subr.mxu0 %v437
    %641 = vmatpush1.msra.mxu0 %v436
    %642 = vmatprep.subr.mxu0 %v435
    %643 = vmatpush1.msra.mxu0 %v434
    %644 = vmatprep.subr.mxu0 %v433
    %645 = vmatpush1.msra.mxu0 %v432
    %646 = vmatprep.subr.mxu0 %v431
    %647 = vmatpush1.msra.mxu0 %v430
    %648 = vmatprep.subr.mxu0 %v429
    %649 = vmatpush1.msra.mxu0 %v428
    %650 = vmatprep.subr.mxu0 %v427
    %651 = vmatpush1.msra.mxu0 %v426
    %652 = vmatprep.subr.mxu0 %v425
    %653 = vmatpush1.msra.mxu0 %v424
    %654 = vmatprep.subr.mxu0 %v423
    %655 = vmatpush1.msra.mxu0 %v422
    %656 = vmatprep.subr.mxu0 %v421
    %657 = vmatpush1.msra.mxu0 %v420
    %658 = vmatprep.subr.mxu0 %v419
    %659 = vmatpush1.msra.mxu0 %v418
    %660 = vmatprep.subr.mxu0 %v417
    %661 = vmatpush1.msra.mxu0 %v416
    %662 = vmatprep.subr.mxu0 %v415
    %663 = vmatpush1.msra.mxu0 %v414
    %664 = vmatprep.subr.mxu0 0.0
    %665 = vmatpush2.msra.mxu0 0.0
    %666 = vmatprep.subr.mxu0 0.0
    %667 = vmatpush2.msra.mxu0 0.0
    %668 = vmatprep.subr.mxu0 0.0
    %669 = vmatpush2.msra.mxu0 0.0
    %670 = vmatprep.subr.mxu0 0.0
    %671 = vmatpush2.msra.mxu0 0.0
    %672 = vmatprep.subr.mxu0 0.0
    %673 = vmatpush2.msra.mxu0 0.0
    %674 = vmatprep.subr.mxu0 0.0
    %675 = vmatpush2.msra.mxu0 0.0
    %676 = vmatprep.subr.mxu0 0.0
    %677 = vmatpush2.msra.mxu0 0.0
    %678 = vmatprep.subr.mxu0 0.0
    %679 = vmatpush2.msra.mxu0 0.0
    %680 = vmatprep.subr.mxu0 0.0
    %681 = vmatpush2.msra.mxu0 0.0
    %682 = vmatprep.subr.mxu0 0.0
    %683 = vmatpush2.msra.mxu0 0.0
    %684 = vmatprep.subr.mxu0 0.0
    %685 = vmatpush2.msra.mxu0 0.0
    %686 = vmatprep.subr.mxu0 0.0
    %687 = vmatpush2.msra.mxu0 0.0
    %688 = vmatprep.subr.mxu0 0.0
    %689 = vmatpush2.msra.mxu0 0.0
    %690 = vmatprep.subr.mxu0 0.0
    %691 = vmatpush2.msra.mxu0 0.0
    %692 = vmatprep.subr.mxu0 0.0
    %693 = vmatpush2.msra.mxu0 0.0
    %694 = vmatprep.subr.mxu0 0.0
    %695 = vmatpush2.msra.mxu0 0.0
    %696 = vmatprep.mubr.f32.mxu0 0.0
    %697 = vmatmul.mubr.f32.gmra.mxu0 %v627
    %v698 = vpop.f32.mrf.mxu0
    %v699 = vadd.f32 0.0, %v698
    %v700 = vpop.f32.mrf.mxu0
    %v701 = vadd.f32 0.0, %v700
    %702 = vdwg.mxu0
    %v703 = vadd.f32 %v629, %v699
    %v704 = vadd.f32 %v630, %v701
    %v705 = vxor.u32 %v703, 2147483648
    %v706 = vxor.u32 %v704, 2147483648
    %v707 = vmul.f32 %v705, 1.442695
    %v708 = vpow.pop %v707
    %v709 = vmul.f32 %v706, 1.442695
    %v710 = vpow.pop %v709
    %v711 = vadd.f32 %v708, 1.0
    %v712 = vadd.f32 %v710, 1.0
    %v713 = vrcp.pop %v711
    %v714 = vmul.f32 1.0, %v713
    %v715 = vrcp.pop %v712
    %v716 = vmul.f32 1.0, %v715
    %v717 = vmul.f32 %v716, %v627
    %718 = vmatprep.subr.mxu0 0.0
    %719 = vmatpush1.msra.mxu0 %v547
    %720 = vmatprep.subr.mxu0 0.0
    %721 = vmatpush1.msra.mxu0 %v546
    %722 = vmatprep.subr.mxu0 0.0
    %723 = vmatpush1.msra.mxu0 %v545
    %724 = vmatprep.subr.mxu0 0.0
    %725 = vmatpush1.msra.mxu0 %v544
    %726 = vmatprep.subr.mxu0 0.0
    %727 = vmatpush1.msra.mxu0 %v543
    %728 = vmatprep.subr.mxu0 0.0
    %729 = vmatpush1.msra.mxu0 %v542
    %730 = vmatprep.subr.mxu0 0.0
    %731 = vmatpush1.msra.mxu0 %v541
    %732 = vmatprep.subr.mxu0 0.0
    %733 = vmatpush1.msra.mxu0 %v540
    %734 = vmatprep.subr.mxu0 0.0
    %735 = vmatpush1.msra.mxu0 %v539
    %736 = vmatprep.subr.mxu0 0.0
    %737 = vmatpush1.msra.mxu0 %v538
    %738 = vmatprep.subr.mxu0 0.0
    %739 = vmatpush1.msra.mxu0 %v537
    %740 = vmatprep.subr.mxu0 0.0
    %741 = vmatpush1.msra.mxu0 %v536
    %742 = vmatprep.subr.mxu0 0.0
    %743 = vmatpush1.msra.mxu0 %v535
    %744 = vmatprep.subr.mxu0 0.0
    %745 = vmatpush1.msra.mxu0 %v534
    %746 = vmatprep.subr.mxu0 0.0
    %747 = vmatpush1.msra.mxu0 %v533
    %748 = vmatprep.subr.mxu0 0.0
    %749 = vmatpush1.msra.mxu0 %v532
    %750 = vmatprep.subr.mxu0 0.0
    %751 = vmatpush2.msra.mxu0 0.0
    %752 = vmatprep.subr.mxu0 0.0
    %753 = vmatpush2.msra.mxu0 0.0
    %754 = vmatprep.subr.mxu0 0.0
    %755 = vmatpush2.msra.mxu0 0.0
    %756 = vmatprep.subr.mxu0 0.0
    %757 = vmatpush2.msra.mxu0 0.0
    %758 = vmatprep.subr.mxu0 0.0
    %759 = vmatpush2.msra.mxu0 0.0
    %760 = vmatprep.subr.mxu0 0.0
    %761 = vmatpush2.msra.mxu0 0.0
    %762 = vmatprep.subr.mxu0 0.0
    %763 = vmatpush2.msra.mxu0 0.0
    %764 = vmatprep.subr.mxu0 0.0
    %765 = vmatpush2.msra.mxu0 0.0
    %766 = vmatprep.subr.mxu0 0.0
    %767 = vmatpush2.msra.mxu0 0.0
    %768 = vmatprep.subr.mxu0 0.0
    %769 = vmatpush2.msra.mxu0 0.0
    %770 = vmatprep.subr.mxu0 0.0
    %771 = vmatpush2.msra.mxu0 0.0
    %772 = vmatprep.subr.mxu0 0.0
    %773 = vmatpush2.msra.mxu0 0.0
    %774 = vmatprep.subr.mxu0 0.0
    %775 = vmatpush2.msra.mxu0 0.0
    %776 = vmatprep.subr.mxu0 0.0
    %777 = vmatpush2.msra.mxu0 0.0
    %778 = vmatprep.subr.mxu0 0.0
    %779 = vmatpush2.msra.mxu0 0.0
    %780 = vmatprep.subr.mxu0 0.0
    %781 = vmatpush2.msra.mxu0 0.0
    %782 = vmatprep.mubr.f32.mxu0 0.0
    %783 = vmatmul.mubr.f32.gmra.mxu0 %v717
    %v784 = vpop.f32.mrf.mxu0
    %v785 = vadd.f32 0.0, %v784
    %v786 = vpop.f32.mrf.mxu0
    %787 = vdwg.mxu0
    %v788 = vadd.f32 %v631, %v785
    %v789 = vxor.u32 %v788, 2147483648
    %v790 = vmul.f32 %v789, 1.442695
    %v791 = vpow.pop %v790
    %v792 = vadd.f32 %v791, 1.0
    %v793 = vrcp.pop %v792
    %v794 = vmul.f32 1.0, %v793
    %v795 = vsub.f32 %v794, %v627
    %v796 = vmul.f32 %v714, %v795
    %v797 = vadd.f32 %v627, %v796
    %s798 = scalar_lea.vmem [#allocation6], 48
    %v799 = vld [vmem:[%s798] sm:$0xff]
    %v800 = vld [vmem:[%s798 + $0x8] sm:$0xff]
    %v801 = vld [vmem:[%s798 + $0x10] sm:$0xff]
    %802 = vmatprep.subr.mxu0 %v445
    %803 = vmatpush1.msra.mxu0 %v444
    %804 = vmatprep.subr.mxu0 %v443
    %805 = vmatpush1.msra.mxu0 %v442
    %806 = vmatprep.subr.mxu0 %v441
    %807 = vmatpush1.msra.mxu0 %v440
    %808 = vmatprep.subr.mxu0 %v439
    %809 = vmatpush1.msra.mxu0 %v438
    %810 = vmatprep.subr.mxu0 %v437
    %811 = vmatpush1.msra.mxu0 %v436
    %812 = vmatprep.subr.mxu0 %v435
    %813 = vmatpush1.msra.mxu0 %v434
    %814 = vmatprep.subr.mxu0 %v433
    %815 = vmatpush1.msra.mxu0 %v432
    %816 = vmatprep.subr.mxu0 %v431
    %817 = vmatpush1.msra.mxu0 %v430
    %818 = vmatprep.subr.mxu0 %v429
    %819 = vmatpush1.msra.mxu0 %v428
    %820 = vmatprep.subr.mxu0 %v427
    %821 = vmatpush1.msra.mxu0 %v426
    %822 = vmatprep.subr.mxu0 %v425
    %823 = vmatpush1.msra.mxu0 %v424
    %824 = vmatprep.subr.mxu0 %v423
    %825 = vmatpush1.msra.mxu0 %v422
    %826 = vmatprep.subr.mxu0 %v421
    %827 = vmatpush1.msra.mxu0 %v420
    %828 = vmatprep.subr.mxu0 %v419
    %829 = vmatpush1.msra.mxu0 %v418
    %830 = vmatprep.subr.mxu0 %v417
    %831 = vmatpush1.msra.mxu0 %v416
    %832 = vmatprep.subr.mxu0 %v415
    %833 = vmatpush1.msra.mxu0 %v414
    %834 = vmatprep.subr.mxu0 0.0
    %835 = vmatpush2.msra.mxu0 0.0
    %836 = vmatprep.subr.mxu0 0.0
    %837 = vmatpush2.msra.mxu0 0.0
    %838 = vmatprep.subr.mxu0 0.0
    %839 = vmatpush2.msra.mxu0 0.0
    %840 = vmatprep.subr.mxu0 0.0
    %841 = vmatpush2.msra.mxu0 0.0
    %842 = vmatprep.subr.mxu0 0.0
    %843 = vmatpush2.msra.mxu0 0.0
    %844 = vmatprep.subr.mxu0 0.0
    %845 = vmatpush2.msra.mxu0 0.0
    %846 = vmatprep.subr.mxu0 0.0
    %847 = vmatpush2.msra.mxu0 0.0
    %848 = vmatprep.subr.mxu0 0.0
    %849 = vmatpush2.msra.mxu0 0.0
    %850 = vmatprep.subr.mxu0 0.0
    %851 = vmatpush2.msra.mxu0 0.0
    %852 = vmatprep.subr.mxu0 0.0
    %853 = vmatpush2.msra.mxu0 0.0
    %854 = vmatprep.subr.mxu0 0.0
    %855 = vmatpush2.msra.mxu0 0.0
    %856 = vmatprep.subr.mxu0 0.0
    %857 = vmatpush2.msra.mxu0 0.0
    %858 = vmatprep.subr.mxu0 0.0
    %859 = vmatpush2.msra.mxu0 0.0
    %860 = vmatprep.subr.mxu0 0.0
    %861 = vmatpush2.msra.mxu0 0.0
    %862 = vmatprep.subr.mxu0 0.0
    %863 = vmatpush2.msra.mxu0 0.0
    %864 = vmatprep.subr.mxu0 0.0
    %865 = vmatpush2.msra.mxu0 0.0
    %866 = vmatprep.mubr.f32.mxu0 0.0
    %867 = vmatmul.mubr.f32.gmra.mxu0 %v797
    %v868 = vpop.f32.mrf.mxu0
    %v869 = vadd.f32 0.0, %v868
    %v870 = vpop.f32.mrf.mxu0
    %v871 = vadd.f32 0.0, %v870
    %872 = vdwg.mxu0
    %v873 = vadd.f32 %v799, %v869
    %v874 = vadd.f32 %v800, %v871
    %v875 = vxor.u32 %v873, 2147483648
    %v876 = vxor.u32 %v874, 2147483648
    %v877 = vmul.f32 %v875, 1.442695
    %v878 = vpow.pop %v877
    %v879 = vmul.f32 %v876, 1.442695
    %v880 = vpow.pop %v879
    %v881 = vadd.f32 %v878, 1.0
    %v882 = vadd.f32 %v880, 1.0
    %v883 = vrcp.pop %v881
    %v884 = vmul.f32 1.0, %v883
    %v885 = vrcp.pop %v882
    %v886 = vmul.f32 1.0, %v885
    %v887 = vmul.f32 %v886, %v797
    %888 = vmatprep.subr.mxu0 0.0
    %889 = vmatpush1.msra.mxu0 %v547
    %890 = vmatprep.subr.mxu0 0.0
    %891 = vmatpush1.msra.mxu0 %v546
    %892 = vmatprep.subr.mxu0 0.0
    %893 = vmatpush1.msra.mxu0 %v545
    %894 = vmatprep.subr.mxu0 0.0
    %895 = vmatpush1.msra.mxu0 %v544
    %896 = vmatprep.subr.mxu0 0.0
    %897 = vmatpush1.msra.mxu0 %v543
    %898 = vmatprep.subr.mxu0 0.0
    %899 = vmatpush1.msra.mxu0 %v542
    %900 = vmatprep.subr.mxu0 0.0
    %901 = vmatpush1.msra.mxu0 %v541
    %902 = vmatprep.subr.mxu0 0.0
    %903 = vmatpush1.msra.mxu0 %v540
    %904 = vmatprep.subr.mxu0 0.0
    %905 = vmatpush1.msra.mxu0 %v539
    %906 = vmatprep.subr.mxu0 0.0
    %907 = vmatpush1.msra.mxu0 %v538
    %908 = vmatprep.subr.mxu0 0.0
    %909 = vmatpush1.msra.mxu0 %v537
    %910 = vmatprep.subr.mxu0 0.0
    %911 = vmatpush1.msra.mxu0 %v536
    %912 = vmatprep.subr.mxu0 0.0
    %913 = vmatpush1.msra.mxu0 %v535
    %914 = vmatprep.subr.mxu0 0.0
    %915 = vmatpush1.msra.mxu0 %v534
    %916 = vmatprep.subr.mxu0 0.0
    %917 = vmatpush1.msra.mxu0 %v533
    %918 = vmatprep.subr.mxu0 0.0
    %919 = vmatpush1.msra.mxu0 %v532
    %920 = vmatprep.subr.mxu0 0.0
    %921 = vmatpush2.msra.mxu0 0.0
    %922 = vmatprep.subr.mxu0 0.0
    %923 = vmatpush2.msra.mxu0 0.0
    %924 = vmatprep.subr.mxu0 0.0
    %925 = vmatpush2.msra.mxu0 0.0
    %926 = vmatprep.subr.mxu0 0.0
    %927 = vmatpush2.msra.mxu0 0.0
    %928 = vmatprep.subr.mxu0 0.0
    %929 = vmatpush2.msra.mxu0 0.0
    %930 = vmatprep.subr.mxu0 0.0
    %931 = vmatpush2.msra.mxu0 0.0
    %932 = vmatprep.subr.mxu0 0.0
    %933 = vmatpush2.msra.mxu0 0.0
    %934 = vmatprep.subr.mxu0 0.0
    %935 = vmatpush2.msra.mxu0 0.0
    %936 = vmatprep.subr.mxu0 0.0
    %937 = vmatpush2.msra.mxu0 0.0
    %938 = vmatprep.subr.mxu0 0.0
    %939 = vmatpush2.msra.mxu0 0.0
    %940 = vmatprep.subr.mxu0 0.0
    %941 = vmatpush2.msra.mxu0 0.0
    %942 = vmatprep.subr.mxu0 0.0
    %943 = vmatpush2.msra.mxu0 0.0
    %944 = vmatprep.subr.mxu0 0.0
    %945 = vmatpush2.msra.mxu0 0.0
    %946 = vmatprep.subr.mxu0 0.0
    %947 = vmatpush2.msra.mxu0 0.0
    %948 = vmatprep.subr.mxu0 0.0
    %949 = vmatpush2.msra.mxu0 0.0
    %950 = vmatprep.subr.mxu0 0.0
    %951 = vmatpush2.msra.mxu0 0.0
    %952 = vmatprep.mubr.f32.mxu0 0.0
    %953 = vmatmul.mubr.f32.gmra.mxu0 %v887
    %v954 = vpop.f32.mrf.mxu0
    %v955 = vadd.f32 0.0, %v954
    %v956 = vpop.f32.mrf.mxu0
    %957 = vdwg.mxu0
    %v958 = vadd.f32 %v801, %v955
    %v959 = vxor.u32 %v958, 2147483648
    %v960 = vmul.f32 %v959, 1.442695
    %v961 = vpow.pop %v960
    %v962 = vadd.f32 %v961, 1.0
    %v963 = vrcp.pop %v962
    %v964 = vmul.f32 1.0, %v963
    %v965 = vsub.f32 %v964, %v797
    %v966 = vmul.f32 %v884, %v965
    %v967 = vadd.f32 %v797, %v966
    %s968 = scalar_lea.vmem [#allocation6], 72
    %v969 = vld [vmem:[%s968] sm:$0xff]
    %v970 = vld [vmem:[%s968 + $0x8] sm:$0xff]
    %v971 = vld [vmem:[%s968 + $0x10] sm:$0xff]
    %972 = vmatprep.subr.mxu0 %v445
    %973 = vmatpush1.msra.mxu0 %v444
    %974 = vmatprep.subr.mxu0 %v443
    %975 = vmatpush1.msra.mxu0 %v442
    %976 = vmatprep.subr.mxu0 %v441
    %977 = vmatpush1.msra.mxu0 %v440
    %978 = vmatprep.subr.mxu0 %v439
    %979 = vmatpush1.msra.mxu0 %v438
    %980 = vmatprep.subr.mxu0 %v437
    %981 = vmatpush1.msra.mxu0 %v436
    %982 = vmatprep.subr.mxu0 %v435
    %983 = vmatpush1.msra.mxu0 %v434
    %984 = vmatprep.subr.mxu0 %v433
    %985 = vmatpush1.msra.mxu0 %v432
    %986 = vmatprep.subr.mxu0 %v431
    %987 = vmatpush1.msra.mxu0 %v430
    %988 = vmatprep.subr.mxu0 %v429
    %989 = vmatpush1.msra.mxu0 %v428
    %990 = vmatprep.subr.mxu0 %v427
    %991 = vmatpush1.msra.mxu0 %v426
    %992 = vmatprep.subr.mxu0 %v425
    %993 = vmatpush1.msra.mxu0 %v424
    %994 = vmatprep.subr.mxu0 %v423
    %995 = vmatpush1.msra.mxu0 %v422
    %996 = vmatprep.subr.mxu0 %v421
    %997 = vmatpush1.msra.mxu0 %v420
    %998 = vmatprep.subr.mxu0 %v419
    %999 = vmatpush1.msra.mxu0 %v418
    %1000 = vmatprep.subr.mxu0 %v417
    %1001 = vmatpush1.msra.mxu0 %v416
    %1002 = vmatprep.subr.mxu0 %v415
    %1003 = vmatpush1.msra.mxu0 %v414
    %1004 = vmatprep.subr.mxu0 0.0
    %1005 = vmatpush2.msra.mxu0 0.0
    %1006 = vmatprep.subr.mxu0 0.0
    %1007 = vmatpush2.msra.mxu0 0.0
    %1008 = vmatprep.subr.mxu0 0.0
    %1009 = vmatpush2.msra.mxu0 0.0
    %1010 = vmatprep.subr.mxu0 0.0
    %1011 = vmatpush2.msra.mxu0 0.0
    %1012 = vmatprep.subr.mxu0 0.0
    %1013 = vmatpush2.msra.mxu0 0.0
    %1014 = vmatprep.subr.mxu0 0.0
    %1015 = vmatpush2.msra.mxu0 0.0
    %1016 = vmatprep.subr.mxu0 0.0
    %1017 = vmatpush2.msra.mxu0 0.0
    %1018 = vmatprep.subr.mxu0 0.0
    %1019 = vmatpush2.msra.mxu0 0.0
    %1020 = vmatprep.subr.mxu0 0.0
    %1021 = vmatpush2.msra.mxu0 0.0
    %1022 = vmatprep.subr.mxu0 0.0
    %1023 = vmatpush2.msra.mxu0 0.0
    %1024 = vmatprep.subr.mxu0 0.0
    %1025 = vmatpush2.msra.mxu0 0.0
    %1026 = vmatprep.subr.mxu0 0.0
    %1027 = vmatpush2.msra.mxu0 0.0
    %1028 = vmatprep.subr.mxu0 0.0
    %1029 = vmatpush2.msra.mxu0 0.0
    %1030 = vmatprep.subr.mxu0 0.0
    %1031 = vmatpush2.msra.mxu0 0.0
    %1032 = vmatprep.subr.mxu0 0.0
    %1033 = vmatpush2.msra.mxu0 0.0
    %1034 = vmatprep.subr.mxu0 0.0
    %1035 = vmatpush2.msra.mxu0 0.0
    %1036 = vmatprep.mubr.f32.mxu0 0.0
    %1037 = vmatmul.mubr.f32.gmra.mxu0 %v967
    %v1038 = vpop.f32.mrf.mxu0
    %v1039 = vadd.f32 0.0, %v1038
    %v1040 = vpop.f32.mrf.mxu0
    %v1041 = vadd.f32 0.0, %v1040
    %1042 = vdwg.mxu0
    %v1043 = vadd.f32 %v969, %v1039
    %v1044 = vadd.f32 %v970, %v1041
    %v1045 = vxor.u32 %v1043, 2147483648
    %v1046 = vxor.u32 %v1044, 2147483648
    %v1047 = vmul.f32 %v1045, 1.442695
    %v1048 = vpow.pop %v1047
    %v1049 = vmul.f32 %v1046, 1.442695
    %v1050 = vpow.pop %v1049
    %v1051 = vadd.f32 %v1048, 1.0
    %v1052 = vadd.f32 %v1050, 1.0
    %v1053 = vrcp.pop %v1051
    %v1054 = vmul.f32 1.0, %v1053
    %v1055 = vrcp.pop %v1052
    %v1056 = vmul.f32 1.0, %v1055
    %v1057 = vmul.f32 %v1056, %v967
    %1058 = vmatprep.subr.mxu0 0.0
    %1059 = vmatpush1.msra.mxu0 %v547
    %1060 = vmatprep.subr.mxu0 0.0
    %1061 = vmatpush1.msra.mxu0 %v546
    %1062 = vmatprep.subr.mxu0 0.0
    %1063 = vmatpush1.msra.mxu0 %v545
    %1064 = vmatprep.subr.mxu0 0.0
    %1065 = vmatpush1.msra.mxu0 %v544
    %1066 = vmatprep.subr.mxu0 0.0
    %1067 = vmatpush1.msra.mxu0 %v543
    %1068 = vmatprep.subr.mxu0 0.0
    %1069 = vmatpush1.msra.mxu0 %v542
    %1070 = vmatprep.subr.mxu0 0.0
    %1071 = vmatpush1.msra.mxu0 %v541
    %1072 = vmatprep.subr.mxu0 0.0
    %1073 = vmatpush1.msra.mxu0 %v540
    %1074 = vmatprep.subr.mxu0 0.0
    %1075 = vmatpush1.msra.mxu0 %v539
    %1076 = vmatprep.subr.mxu0 0.0
    %1077 = vmatpush1.msra.mxu0 %v538
    %1078 = vmatprep.subr.mxu0 0.0
    %1079 = vmatpush1.msra.mxu0 %v537
    %1080 = vmatprep.subr.mxu0 0.0
    %1081 = vmatpush1.msra.mxu0 %v536
    %1082 = vmatprep.subr.mxu0 0.0
    %1083 = vmatpush1.msra.mxu0 %v535
    %1084 = vmatprep.subr.mxu0 0.0
    %1085 = vmatpush1.msra.mxu0 %v534
    %1086 = vmatprep.subr.mxu0 0.0
    %1087 = vmatpush1.msra.mxu0 %v533
    %1088 = vmatprep.subr.mxu0 0.0
    %1089 = vmatpush1.msra.mxu0 %v532
    %1090 = vmatprep.subr.mxu0 0.0
    %1091 = vmatpush2.msra.mxu0 0.0
    %1092 = vmatprep.subr.mxu0 0.0
    %1093 = vmatpush2.msra.mxu0 0.0
    %1094 = vmatprep.subr.mxu0 0.0
    %1095 = vmatpush2.msra.mxu0 0.0
    %1096 = vmatprep.subr.mxu0 0.0
    %1097 = vmatpush2.msra.mxu0 0.0
    %1098 = vmatprep.subr.mxu0 0.0
    %1099 = vmatpush2.msra.mxu0 0.0
    %1100 = vmatprep.subr.mxu0 0.0
    %1101 = vmatpush2.msra.mxu0 0.0
    %1102 = vmatprep.subr.mxu0 0.0
    %1103 = vmatpush2.msra.mxu0 0.0
    %1104 = vmatprep.subr.mxu0 0.0
    %1105 = vmatpush2.msra.mxu0 0.0
    %1106 = vmatprep.subr.mxu0 0.0
    %1107 = vmatpush2.msra.mxu0 0.0
    %1108 = vmatprep.subr.mxu0 0.0
    %1109 = vmatpush2.msra.mxu0 0.0
    %1110 = vmatprep.subr.mxu0 0.0
    %1111 = vmatpush2.msra.mxu0 0.0
    %1112 = vmatprep.subr.mxu0 0.0
    %1113 = vmatpush2.msra.mxu0 0.0
    %1114 = vmatprep.subr.mxu0 0.0
    %1115 = vmatpush2.msra.mxu0 0.0
    %1116 = vmatprep.subr.mxu0 0.0
    %1117 = vmatpush2.msra.mxu0 0.0
    %1118 = vmatprep.subr.mxu0 0.0
    %1119 = vmatpush2.msra.mxu0 0.0
    %1120 = vmatprep.subr.mxu0 0.0
    %1121 = vmatpush2.msra.mxu0 0.0
    %1122 = vmatprep.mubr.f32.mxu0 0.0
    %1123 = vmatmul.mubr.f32.gmra.mxu0 %v1057
    %v1124 = vpop.f32.mrf.mxu0
    %v1125 = vadd.f32 0.0, %v1124
    %v1126 = vpop.f32.mrf.mxu0
    %1127 = vdwg.mxu0
    %v1128 = vadd.f32 %v971, %v1125
    %v1129 = vxor.u32 %v1128, 2147483648
    %v1130 = vmul.f32 %v1129, 1.442695
    %v1131 = vpow.pop %v1130
    %v1132 = vadd.f32 %v1131, 1.0
    %v1133 = vrcp.pop %v1132
    %v1134 = vmul.f32 1.0, %v1133
    %v1135 = vsub.f32 %v1134, %v967
    %v1136 = vmul.f32 %v1054, %v1135
    %v1137 = vadd.f32 %v967, %v1136
    %s1138 = scalar_lea.vmem [#allocation6], 96
    %v1139 = vld [vmem:[%s1138] sm:$0xff]
    %v1140 = vld [vmem:[%s1138 + $0x8] sm:$0xff]
    %v1141 = vld [vmem:[%s1138 + $0x10] sm:$0xff]
    %1142 = vmatprep.subr.mxu0 %v445
    %1143 = vmatpush1.msra.mxu0 %v444
    %1144 = vmatprep.subr.mxu0 %v443
    %1145 = vmatpush1.msra.mxu0 %v442
    %1146 = vmatprep.subr.mxu0 %v441
    %1147 = vmatpush1.msra.mxu0 %v440
    %1148 = vmatprep.subr.mxu0 %v439
    %1149 = vmatpush1.msra.mxu0 %v438
    %1150 = vmatprep.subr.mxu0 %v437
    %1151 = vmatpush1.msra.mxu0 %v436
    %1152 = vmatprep.subr.mxu0 %v435
    %1153 = vmatpush1.msra.mxu0 %v434
    %1154 = vmatprep.subr.mxu0 %v433
    %1155 = vmatpush1.msra.mxu0 %v432
    %1156 = vmatprep.subr.mxu0 %v431
    %1157 = vmatpush1.msra.mxu0 %v430
    %1158 = vmatprep.subr.mxu0 %v429
    %1159 = vmatpush1.msra.mxu0 %v428
    %1160 = vmatprep.subr.mxu0 %v427
    %1161 = vmatpush1.msra.mxu0 %v426
    %1162 = vmatprep.subr.mxu0 %v425
    %1163 = vmatpush1.msra.mxu0 %v424
    %1164 = vmatprep.subr.mxu0 %v423
    %1165 = vmatpush1.msra.mxu0 %v422
    %1166 = vmatprep.subr.mxu0 %v421
    %1167 = vmatpush1.msra.mxu0 %v420
    %1168 = vmatprep.subr.mxu0 %v419
    %1169 = vmatpush1.msra.mxu0 %v418
    %1170 = vmatprep.subr.mxu0 %v417
    %1171 = vmatpush1.msra.mxu0 %v416
    %1172 = vmatprep.subr.mxu0 %v415
    %1173 = vmatpush1.msra.mxu0 %v414
    %1174 = vmatprep.subr.mxu0 0.0
    %1175 = vmatpush2.msra.mxu0 0.0
    %1176 = vmatprep.subr.mxu0 0.0
    %1177 = vmatpush2.msra.mxu0 0.0
    %1178 = vmatprep.subr.mxu0 0.0
    %1179 = vmatpush2.msra.mxu0 0.0
    %1180 = vmatprep.subr.mxu0 0.0
    %1181 = vmatpush2.msra.mxu0 0.0
    %1182 = vmatprep.subr.mxu0 0.0
    %1183 = vmatpush2.msra.mxu0 0.0
    %1184 = vmatprep.subr.mxu0 0.0
    %1185 = vmatpush2.msra.mxu0 0.0
    %1186 = vmatprep.subr.mxu0 0.0
    %1187 = vmatpush2.msra.mxu0 0.0
    %1188 = vmatprep.subr.mxu0 0.0
    %1189 = vmatpush2.msra.mxu0 0.0
    %1190 = vmatprep.subr.mxu0 0.0
    %1191 = vmatpush2.msra.mxu0 0.0
    %1192 = vmatprep.subr.mxu0 0.0
    %1193 = vmatpush2.msra.mxu0 0.0
    %1194 = vmatprep.subr.mxu0 0.0
    %1195 = vmatpush2.msra.mxu0 0.0
    %1196 = vmatprep.subr.mxu0 0.0
    %1197 = vmatpush2.msra.mxu0 0.0
    %1198 = vmatprep.subr.mxu0 0.0
    %1199 = vmatpush2.msra.mxu0 0.0
    %1200 = vmatprep.subr.mxu0 0.0
    %1201 = vmatpush2.msra.mxu0 0.0
    %1202 = vmatprep.subr.mxu0 0.0
    %1203 = vmatpush2.msra.mxu0 0.0
    %1204 = vmatprep.subr.mxu0 0.0
    %1205 = vmatpush2.msra.mxu0 0.0
    %1206 = vmatprep.mubr.f32.mxu0 0.0
    %1207 = vmatmul.mubr.f32.gmra.mxu0 %v1137
    %v1208 = vpop.f32.mrf.mxu0
    %v1209 = vadd.f32 0.0, %v1208
    %v1210 = vpop.f32.mrf.mxu0
    %v1211 = vadd.f32 0.0, %v1210
    %1212 = vdwg.mxu0
    %v1213 = vadd.f32 %v1139, %v1209
    %v1214 = vadd.f32 %v1140, %v1211
    %v1215 = vxor.u32 %v1213, 2147483648
    %v1216 = vxor.u32 %v1214, 2147483648
    %v1217 = vmul.f32 %v1215, 1.442695
    %v1218 = vpow.pop %v1217
    %v1219 = vmul.f32 %v1216, 1.442695
    %v1220 = vpow.pop %v1219
    %v1221 = vadd.f32 %v1218, 1.0
    %v1222 = vadd.f32 %v1220, 1.0
    %v1223 = vrcp.pop %v1221
    %v1224 = vmul.f32 1.0, %v1223
    %v1225 = vrcp.pop %v1222
    %v1226 = vmul.f32 1.0, %v1225
    %v1227 = vmul.f32 %v1226, %v1137
    %1228 = vmatprep.subr.mxu0 0.0
    %1229 = vmatpush1.msra.mxu0 %v547
    %1230 = vmatprep.subr.mxu0 0.0
    %1231 = vmatpush1.msra.mxu0 %v546
    %1232 = vmatprep.subr.mxu0 0.0
    %1233 = vmatpush1.msra.mxu0 %v545
    %1234 = vmatprep.subr.mxu0 0.0
    %1235 = vmatpush1.msra.mxu0 %v544
    %1236 = vmatprep.subr.mxu0 0.0
    %1237 = vmatpush1.msra.mxu0 %v543
    %1238 = vmatprep.subr.mxu0 0.0
    %1239 = vmatpush1.msra.mxu0 %v542
    %1240 = vmatprep.subr.mxu0 0.0
    %1241 = vmatpush1.msra.mxu0 %v541
    %1242 = vmatprep.subr.mxu0 0.0
    %1243 = vmatpush1.msra.mxu0 %v540
    %1244 = vmatprep.subr.mxu0 0.0
    %1245 = vmatpush1.msra.mxu0 %v539
    %1246 = vmatprep.subr.mxu0 0.0
    %1247 = vmatpush1.msra.mxu0 %v538
    %1248 = vmatprep.subr.mxu0 0.0
    %1249 = vmatpush1.msra.mxu0 %v537
    %1250 = vmatprep.subr.mxu0 0.0
    %1251 = vmatpush1.msra.mxu0 %v536
    %1252 = vmatprep.subr.mxu0 0.0
    %1253 = vmatpush1.msra.mxu0 %v535
    %1254 = vmatprep.subr.mxu0 0.0
    %1255 = vmatpush1.msra.mxu0 %v534
    %1256 = vmatprep.subr.mxu0 0.0
    %1257 = vmatpush1.msra.mxu0 %v533
    %1258 = vmatprep.subr.mxu0 0.0
    %1259 = vmatpush1.msra.mxu0 %v532
    %1260 = vmatprep.subr.mxu0 0.0
    %1261 = vmatpush2.msra.mxu0 0.0
    %1262 = vmatprep.subr.mxu0 0.0
    %1263 = vmatpush2.msra.mxu0 0.0
    %1264 = vmatprep.subr.mxu0 0.0
    %1265 = vmatpush2.msra.mxu0 0.0
    %1266 = vmatprep.subr.mxu0 0.0
    %1267 = vmatpush2.msra.mxu0 0.0
    %1268 = vmatprep.subr.mxu0 0.0
    %1269 = vmatpush2.msra.mxu0 0.0
    %1270 = vmatprep.subr.mxu0 0.0
    %1271 = vmatpush2.msra.mxu0 0.0
    %1272 = vmatprep.subr.mxu0 0.0
    %1273 = vmatpush2.msra.mxu0 0.0
    %1274 = vmatprep.subr.mxu0 0.0
    %1275 = vmatpush2.msra.mxu0 0.0
    %1276 = vmatprep.subr.mxu0 0.0
    %1277 = vmatpush2.msra.mxu0 0.0
    %1278 = vmatprep.subr.mxu0 0.0
    %1279 = vmatpush2.msra.mxu0 0.0
    %1280 = vmatprep.subr.mxu0 0.0
    %1281 = vmatpush2.msra.mxu0 0.0
    %1282 = vmatprep.subr.mxu0 0.0
    %1283 = vmatpush2.msra.mxu0 0.0
    %1284 = vmatprep.subr.mxu0 0.0
    %1285 = vmatpush2.msra.mxu0 0.0
    %1286 = vmatprep.subr.mxu0 0.0
    %1287 = vmatpush2.msra.mxu0 0.0
    %1288 = vmatprep.subr.mxu0 0.0
    %1289 = vmatpush2.msra.mxu0 0.0
    %1290 = vmatprep.subr.mxu0 0.0
    %1291 = vmatpush2.msra.mxu0 0.0
    %1292 = vmatprep.mubr.f32.mxu0 0.0
    %1293 = vmatmul.mubr.f32.gmra.mxu0 %v1227
    %v1294 = vpop.f32.mrf.mxu0
    %v1295 = vadd.f32 0.0, %v1294
    %v1296 = vpop.f32.mrf.mxu0
    %1297 = vdwg.mxu0
    %v1298 = vadd.f32 %v1141, %v1295
    %v1299 = vxor.u32 %v1298, 2147483648
    %v1300 = vmul.f32 %v1299, 1.442695
    %v1301 = vpow.pop %v1300
    %v1302 = vadd.f32 %v1301, 1.0
    %v1303 = vrcp.pop %v1302
    %v1304 = vmul.f32 1.0, %v1303
    %v1305 = vsub.f32 %v1304, %v1137
    %v1306 = vmul.f32 %v1224, %v1305
    %v1307 = vadd.f32 %v1137, %v1306
    %s1308 = scalar_lea.vmem [#allocation6], 120
    %v1309 = vld [vmem:[%s1308] sm:$0xff]
    %v1310 = vld [vmem:[%s1308 + $0x8] sm:$0xff]
    %v1311 = vld [vmem:[%s1308 + $0x10] sm:$0xff]
    %1312 = vmatprep.subr.mxu0 %v445
    %1313 = vmatpush1.msra.mxu0 %v444
    %1314 = vmatprep.subr.mxu0 %v443
    %1315 = vmatpush1.msra.mxu0 %v442
    %1316 = vmatprep.subr.mxu0 %v441
    %1317 = vmatpush1.msra.mxu0 %v440
    %1318 = vmatprep.subr.mxu0 %v439
    %1319 = vmatpush1.msra.mxu0 %v438
    %1320 = vmatprep.subr.mxu0 %v437
    %1321 = vmatpush1.msra.mxu0 %v436
    %1322 = vmatprep.subr.mxu0 %v435
    %1323 = vmatpush1.msra.mxu0 %v434
    %1324 = vmatprep.subr.mxu0 %v433
    %1325 = vmatpush1.msra.mxu0 %v432
    %1326 = vmatprep.subr.mxu0 %v431
    %1327 = vmatpush1.msra.mxu0 %v430
    %1328 = vmatprep.subr.mxu0 %v429
    %1329 = vmatpush1.msra.mxu0 %v428
    %1330 = vmatprep.subr.mxu0 %v427
    %1331 = vmatpush1.msra.mxu0 %v426
    %1332 = vmatprep.subr.mxu0 %v425
    %1333 = vmatpush1.msra.mxu0 %v424
    %1334 = vmatprep.subr.mxu0 %v423
    %1335 = vmatpush1.msra.mxu0 %v422
    %1336 = vmatprep.subr.mxu0 %v421
    %1337 = vmatpush1.msra.mxu0 %v420
    %1338 = vmatprep.subr.mxu0 %v419
    %1339 = vmatpush1.msra.mxu0 %v418
    %1340 = vmatprep.subr.mxu0 %v417
    %1341 = vmatpush1.msra.mxu0 %v416
    %1342 = vmatprep.subr.mxu0 %v415
    %1343 = vmatpush1.msra.mxu0 %v414
    %1344 = vmatprep.subr.mxu0 0.0
    %1345 = vmatpush2.msra.mxu0 0.0
    %1346 = vmatprep.subr.mxu0 0.0
    %1347 = vmatpush2.msra.mxu0 0.0
    %1348 = vmatprep.subr.mxu0 0.0
    %1349 = vmatpush2.msra.mxu0 0.0
    %1350 = vmatprep.subr.mxu0 0.0
    %1351 = vmatpush2.msra.mxu0 0.0
    %1352 = vmatprep.subr.mxu0 0.0
    %1353 = vmatpush2.msra.mxu0 0.0
    %1354 = vmatprep.subr.mxu0 0.0
    %1355 = vmatpush2.msra.mxu0 0.0
    %1356 = vmatprep.subr.mxu0 0.0
    %1357 = vmatpush2.msra.mxu0 0.0
    %1358 = vmatprep.subr.mxu0 0.0
    %1359 = vmatpush2.msra.mxu0 0.0
    %1360 = vmatprep.subr.mxu0 0.0
    %1361 = vmatpush2.msra.mxu0 0.0
    %1362 = vmatprep.subr.mxu0 0.0
    %1363 = vmatpush2.msra.mxu0 0.0
    %1364 = vmatprep.subr.mxu0 0.0
    %1365 = vmatpush2.msra.mxu0 0.0
    %1366 = vmatprep.subr.mxu0 0.0
    %1367 = vmatpush2.msra.mxu0 0.0
    %1368 = vmatprep.subr.mxu0 0.0
    %1369 = vmatpush2.msra.mxu0 0.0
    %1370 = vmatprep.subr.mxu0 0.0
    %1371 = vmatpush2.msra.mxu0 0.0
    %1372 = vmatprep.subr.mxu0 0.0
    %1373 = vmatpush2.msra.mxu0 0.0
    %1374 = vmatprep.subr.mxu0 0.0
    %1375 = vmatpush2.msra.mxu0 0.0
    %1376 = vmatprep.mubr.f32.mxu0 0.0
    %1377 = vmatmul.mubr.f32.gmra.mxu0 %v1307
    %v1378 = vpop.f32.mrf.mxu0
    %v1379 = vadd.f32 0.0, %v1378
    %v1380 = vpop.f32.mrf.mxu0
    %v1381 = vadd.f32 0.0, %v1380
    %1382 = vdwg.mxu0
    %v1383 = vadd.f32 %v1309, %v1379
    %v1384 = vadd.f32 %v1310, %v1381
    %v1385 = vxor.u32 %v1383, 2147483648
    %v1386 = vxor.u32 %v1384, 2147483648
    %v1387 = vmul.f32 %v1385, 1.442695
    %v1388 = vpow.pop %v1387
    %v1389 = vmul.f32 %v1386, 1.442695
    %v1390 = vpow.pop %v1389
    %v1391 = vadd.f32 %v1388, 1.0
    %v1392 = vadd.f32 %v1390, 1.0
    %v1393 = vrcp.pop %v1391
    %v1394 = vmul.f32 1.0, %v1393
    %v1395 = vrcp.pop %v1392
    %v1396 = vmul.f32 1.0, %v1395
    %v1397 = vmul.f32 %v1396, %v1307
    %1398 = vmatprep.subr.mxu0 0.0
    %1399 = vmatpush1.msra.mxu0 %v547
    %1400 = vmatprep.subr.mxu0 0.0
    %1401 = vmatpush1.msra.mxu0 %v546
    %1402 = vmatprep.subr.mxu0 0.0
    %1403 = vmatpush1.msra.mxu0 %v545
    %1404 = vmatprep.subr.mxu0 0.0
    %1405 = vmatpush1.msra.mxu0 %v544
    %1406 = vmatprep.subr.mxu0 0.0
    %1407 = vmatpush1.msra.mxu0 %v543
    %1408 = vmatprep.subr.mxu0 0.0
    %1409 = vmatpush1.msra.mxu0 %v542
    %1410 = vmatprep.subr.mxu0 0.0
    %1411 = vmatpush1.msra.mxu0 %v541
    %1412 = vmatprep.subr.mxu0 0.0
    %1413 = vmatpush1.msra.mxu0 %v540
    %1414 = vmatprep.subr.mxu0 0.0
    %1415 = vmatpush1.msra.mxu0 %v539
    %1416 = vmatprep.subr.mxu0 0.0
    %1417 = vmatpush1.msra.mxu0 %v538
    %1418 = vmatprep.subr.mxu0 0.0
    %1419 = vmatpush1.msra.mxu0 %v537
    %1420 = vmatprep.subr.mxu0 0.0
    %1421 = vmatpush1.msra.mxu0 %v536
    %1422 = vmatprep.subr.mxu0 0.0
    %1423 = vmatpush1.msra.mxu0 %v535
    %1424 = vmatprep.subr.mxu0 0.0
    %1425 = vmatpush1.msra.mxu0 %v534
    %1426 = vmatprep.subr.mxu0 0.0
    %1427 = vmatpush1.msra.mxu0 %v533
    %1428 = vmatprep.subr.mxu0 0.0
    %1429 = vmatpush1.msra.mxu0 %v532
    %1430 = vmatprep.subr.mxu0 0.0
    %1431 = vmatpush2.msra.mxu0 0.0
    %1432 = vmatprep.subr.mxu0 0.0
    %1433 = vmatpush2.msra.mxu0 0.0
    %1434 = vmatprep.subr.mxu0 0.0
    %1435 = vmatpush2.msra.mxu0 0.0
    %1436 = vmatprep.subr.mxu0 0.0
    %1437 = vmatpush2.msra.mxu0 0.0
    %1438 = vmatprep.subr.mxu0 0.0
    %1439 = vmatpush2.msra.mxu0 0.0
    %1440 = vmatprep.subr.mxu0 0.0
    %1441 = vmatpush2.msra.mxu0 0.0
    %1442 = vmatprep.subr.mxu0 0.0
    %1443 = vmatpush2.msra.mxu0 0.0
    %1444 = vmatprep.subr.mxu0 0.0
    %1445 = vmatpush2.msra.mxu0 0.0
    %1446 = vmatprep.subr.mxu0 0.0
    %1447 = vmatpush2.msra.mxu0 0.0
    %1448 = vmatprep.subr.mxu0 0.0
    %1449 = vmatpush2.msra.mxu0 0.0
    %1450 = vmatprep.subr.mxu0 0.0
    %1451 = vmatpush2.msra.mxu0 0.0
    %1452 = vmatprep.subr.mxu0 0.0
    %1453 = vmatpush2.msra.mxu0 0.0
    %1454 = vmatprep.subr.mxu0 0.0
    %1455 = vmatpush2.msra.mxu0 0.0
    %1456 = vmatprep.subr.mxu0 0.0
    %1457 = vmatpush2.msra.mxu0 0.0
    %1458 = vmatprep.subr.mxu0 0.0
    %1459 = vmatpush2.msra.mxu0 0.0
    %1460 = vmatprep.subr.mxu0 0.0
    %1461 = vmatpush2.msra.mxu0 0.0
    %1462 = vmatprep.mubr.f32.mxu0 0.0
    %1463 = vmatmul.mubr.f32.gmra.mxu0 %v1397
    %v1464 = vpop.f32.mrf.mxu0
    %v1465 = vadd.f32 0.0, %v1464
    %v1466 = vpop.f32.mrf.mxu0
    %1467 = vdwg.mxu0
    %v1468 = vadd.f32 %v1311, %v1465
    %v1469 = vxor.u32 %v1468, 2147483648
    %v1470 = vmul.f32 %v1469, 1.442695
    %v1471 = vpow.pop %v1470
    %v1472 = vadd.f32 %v1471, 1.0
    %v1473 = vrcp.pop %v1472
    %v1474 = vmul.f32 1.0, %v1473
    %v1475 = vsub.f32 %v1474, %v1307
    %v1476 = vmul.f32 %v1394, %v1475
    %v1477 = vadd.f32 %v1307, %v1476
    %s1478 = scalar_lea.vmem [#allocation6], 144
    %v1479 = vld [vmem:[%s1478] sm:$0xff]
    %v1480 = vld [vmem:[%s1478 + $0x8] sm:$0xff]
    %v1481 = vld [vmem:[%s1478 + $0x10] sm:$0xff]
    %1482 = vmatprep.subr.mxu0 %v445
    %1483 = vmatpush1.msra.mxu0 %v444
    %1484 = vmatprep.subr.mxu0 %v443
    %1485 = vmatpush1.msra.mxu0 %v442
    %1486 = vmatprep.subr.mxu0 %v441
    %1487 = vmatpush1.msra.mxu0 %v440
    %1488 = vmatprep.subr.mxu0 %v439
    %1489 = vmatpush1.msra.mxu0 %v438
    %1490 = vmatprep.subr.mxu0 %v437
    %1491 = vmatpush1.msra.mxu0 %v436
    %1492 = vmatprep.subr.mxu0 %v435
    %1493 = vmatpush1.msra.mxu0 %v434
    %1494 = vmatprep.subr.mxu0 %v433
    %1495 = vmatpush1.msra.mxu0 %v432
    %1496 = vmatprep.subr.mxu0 %v431
    %1497 = vmatpush1.msra.mxu0 %v430
    %1498 = vmatprep.subr.mxu0 %v429
    %1499 = vmatpush1.msra.mxu0 %v428
    %1500 = vmatprep.subr.mxu0 %v427
    %1501 = vmatpush1.msra.mxu0 %v426
    %1502 = vmatprep.subr.mxu0 %v425
    %1503 = vmatpush1.msra.mxu0 %v424
    %1504 = vmatprep.subr.mxu0 %v423
    %1505 = vmatpush1.msra.mxu0 %v422
    %1506 = vmatprep.subr.mxu0 %v421
    %1507 = vmatpush1.msra.mxu0 %v420
    %1508 = vmatprep.subr.mxu0 %v419
    %1509 = vmatpush1.msra.mxu0 %v418
    %1510 = vmatprep.subr.mxu0 %v417
    %1511 = vmatpush1.msra.mxu0 %v416
    %1512 = vmatprep.subr.mxu0 %v415
    %1513 = vmatpush1.msra.mxu0 %v414
    %1514 = vmatprep.subr.mxu0 0.0
    %1515 = vmatpush2.msra.mxu0 0.0
    %1516 = vmatprep.subr.mxu0 0.0
    %1517 = vmatpush2.msra.mxu0 0.0
    %1518 = vmatprep.subr.mxu0 0.0
    %1519 = vmatpush2.msra.mxu0 0.0
    %1520 = vmatprep.subr.mxu0 0.0
    %1521 = vmatpush2.msra.mxu0 0.0
    %1522 = vmatprep.subr.mxu0 0.0
    %1523 = vmatpush2.msra.mxu0 0.0
    %1524 = vmatprep.subr.mxu0 0.0
    %1525 = vmatpush2.msra.mxu0 0.0
    %1526 = vmatprep.subr.mxu0 0.0
    %1527 = vmatpush2.msra.mxu0 0.0
    %1528 = vmatprep.subr.mxu0 0.0
    %1529 = vmatpush2.msra.mxu0 0.0
    %1530 = vmatprep.subr.mxu0 0.0
    %1531 = vmatpush2.msra.mxu0 0.0
    %1532 = vmatprep.subr.mxu0 0.0
    %1533 = vmatpush2.msra.mxu0 0.0
    %1534 = vmatprep.subr.mxu0 0.0
    %1535 = vmatpush2.msra.mxu0 0.0
    %1536 = vmatprep.subr.mxu0 0.0
    %1537 = vmatpush2.msra.mxu0 0.0
    %1538 = vmatprep.subr.mxu0 0.0
    %1539 = vmatpush2.msra.mxu0 0.0
    %1540 = vmatprep.subr.mxu0 0.0
    %1541 = vmatpush2.msra.mxu0 0.0
    %1542 = vmatprep.subr.mxu0 0.0
    %1543 = vmatpush2.msra.mxu0 0.0
    %1544 = vmatprep.subr.mxu0 0.0
    %1545 = vmatpush2.msra.mxu0 0.0
    %1546 = vmatprep.mubr.f32.mxu0 0.0
    %1547 = vmatmul.mubr.f32.gmra.mxu0 %v1477
    %v1548 = vpop.f32.mrf.mxu0
    %v1549 = vadd.f32 0.0, %v1548
    %v1550 = vpop.f32.mrf.mxu0
    %v1551 = vadd.f32 0.0, %v1550
    %1552 = vdwg.mxu0
    %v1553 = vadd.f32 %v1479, %v1549
    %v1554 = vadd.f32 %v1480, %v1551
    %v1555 = vxor.u32 %v1553, 2147483648
    %v1556 = vxor.u32 %v1554, 2147483648
    %v1557 = vmul.f32 %v1555, 1.442695
    %v1558 = vpow.pop %v1557
    %v1559 = vmul.f32 %v1556, 1.442695
    %v1560 = vpow.pop %v1559
    %v1561 = vadd.f32 %v1558, 1.0
    %v1562 = vadd.f32 %v1560, 1.0
    %v1563 = vrcp.pop %v1561
    %v1564 = vmul.f32 1.0, %v1563
    %v1565 = vrcp.pop %v1562
    %v1566 = vmul.f32 1.0, %v1565
    %v1567 = vmul.f32 %v1566, %v1477
    %1568 = vmatprep.subr.mxu0 0.0
    %1569 = vmatpush1.msra.mxu0 %v547
    %1570 = vmatprep.subr.mxu0 0.0
    %1571 = vmatpush1.msra.mxu0 %v546
    %1572 = vmatprep.subr.mxu0 0.0
    %1573 = vmatpush1.msra.mxu0 %v545
    %1574 = vmatprep.subr.mxu0 0.0
    %1575 = vmatpush1.msra.mxu0 %v544
    %1576 = vmatprep.subr.mxu0 0.0
    %1577 = vmatpush1.msra.mxu0 %v543
    %1578 = vmatprep.subr.mxu0 0.0
    %1579 = vmatpush1.msra.mxu0 %v542
    %1580 = vmatprep.subr.mxu0 0.0
    %1581 = vmatpush1.msra.mxu0 %v541
    %1582 = vmatprep.subr.mxu0 0.0
    %1583 = vmatpush1.msra.mxu0 %v540
    %1584 = vmatprep.subr.mxu0 0.0
    %1585 = vmatpush1.msra.mxu0 %v539
    %1586 = vmatprep.subr.mxu0 0.0
    %1587 = vmatpush1.msra.mxu0 %v538
    %1588 = vmatprep.subr.mxu0 0.0
    %1589 = vmatpush1.msra.mxu0 %v537
    %1590 = vmatprep.subr.mxu0 0.0
    %1591 = vmatpush1.msra.mxu0 %v536
    %1592 = vmatprep.subr.mxu0 0.0
    %1593 = vmatpush1.msra.mxu0 %v535
    %1594 = vmatprep.subr.mxu0 0.0
    %1595 = vmatpush1.msra.mxu0 %v534
    %1596 = vmatprep.subr.mxu0 0.0
    %1597 = vmatpush1.msra.mxu0 %v533
    %1598 = vmatprep.subr.mxu0 0.0
    %1599 = vmatpush1.msra.mxu0 %v532
    %1600 = vmatprep.subr.mxu0 0.0
    %1601 = vmatpush2.msra.mxu0 0.0
    %1602 = vmatprep.subr.mxu0 0.0
    %1603 = vmatpush2.msra.mxu0 0.0
    %1604 = vmatprep.subr.mxu0 0.0
    %1605 = vmatpush2.msra.mxu0 0.0
    %1606 = vmatprep.subr.mxu0 0.0
    %1607 = vmatpush2.msra.mxu0 0.0
    %1608 = vmatprep.subr.mxu0 0.0
    %1609 = vmatpush2.msra.mxu0 0.0
    %1610 = vmatprep.subr.mxu0 0.0
    %1611 = vmatpush2.msra.mxu0 0.0
    %1612 = vmatprep.subr.mxu0 0.0
    %1613 = vmatpush2.msra.mxu0 0.0
    %1614 = vmatprep.subr.mxu0 0.0
    %1615 = vmatpush2.msra.mxu0 0.0
    %1616 = vmatprep.subr.mxu0 0.0
    %1617 = vmatpush2.msra.mxu0 0.0
    %1618 = vmatprep.subr.mxu0 0.0
    %1619 = vmatpush2.msra.mxu0 0.0
    %1620 = vmatprep.subr.mxu0 0.0
    %1621 = vmatpush2.msra.mxu0 0.0
    %1622 = vmatprep.subr.mxu0 0.0
    %1623 = vmatpush2.msra.mxu0 0.0
    %1624 = vmatprep.subr.mxu0 0.0
    %1625 = vmatpush2.msra.mxu0 0.0
    %1626 = vmatprep.subr.mxu0 0.0
    %1627 = vmatpush2.msra.mxu0 0.0
    %1628 = vmatprep.subr.mxu0 0.0
    %1629 = vmatpush2.msra.mxu0 0.0
    %1630 = vmatprep.subr.mxu0 0.0
    %1631 = vmatpush2.msra.mxu0 0.0
    %1632 = vmatprep.mubr.f32.mxu0 0.0
    %1633 = vmatmul.mubr.f32.gmra.mxu0 %v1567
    %v1634 = vpop.f32.mrf.mxu0
    %v1635 = vadd.f32 0.0, %v1634
    %v1636 = vpop.f32.mrf.mxu0
    %1637 = vdwg.mxu0
    %v1638 = vadd.f32 %v1481, %v1635
    %v1639 = vxor.u32 %v1638, 2147483648
    %v1640 = vmul.f32 %v1639, 1.442695
    %v1641 = vpow.pop %v1640
    %v1642 = vadd.f32 %v1641, 1.0
    %v1643 = vrcp.pop %v1642
    %v1644 = vmul.f32 1.0, %v1643
    %v1645 = vsub.f32 %v1644, %v1477
    %v1646 = vmul.f32 %v1564, %v1645
    %v1647 = vadd.f32 %v1477, %v1646
    %s1648 = scalar_lea.vmem [#allocation6], 168
    %v1649 = vld [vmem:[%s1648] sm:$0xff]
    %v1650 = vld [vmem:[%s1648 + $0x8] sm:$0xff]
    %v1651 = vld [vmem:[%s1648 + $0x10] sm:$0xff]
    %1652 = vmatprep.subr.mxu0 %v445
    %1653 = vmatpush1.msra.mxu0 %v444
    %1654 = vmatprep.subr.mxu0 %v443
    %1655 = vmatpush1.msra.mxu0 %v442
    %1656 = vmatprep.subr.mxu0 %v441
    %1657 = vmatpush1.msra.mxu0 %v440
    %1658 = vmatprep.subr.mxu0 %v439
    %1659 = vmatpush1.msra.mxu0 %v438
    %1660 = vmatprep.subr.mxu0 %v437
    %1661 = vmatpush1.msra.mxu0 %v436
    %1662 = vmatprep.subr.mxu0 %v435
    %1663 = vmatpush1.msra.mxu0 %v434
    %1664 = vmatprep.subr.mxu0 %v433
    %1665 = vmatpush1.msra.mxu0 %v432
    %1666 = vmatprep.subr.mxu0 %v431
    %1667 = vmatpush1.msra.mxu0 %v430
    %1668 = vmatprep.subr.mxu0 %v429
    %1669 = vmatpush1.msra.mxu0 %v428
    %1670 = vmatprep.subr.mxu0 %v427
    %1671 = vmatpush1.msra.mxu0 %v426
    %1672 = vmatprep.subr.mxu0 %v425
    %1673 = vmatpush1.msra.mxu0 %v424
    %1674 = vmatprep.subr.mxu0 %v423
    %1675 = vmatpush1.msra.mxu0 %v422
    %1676 = vmatprep.subr.mxu0 %v421
    %1677 = vmatpush1.msra.mxu0 %v420
    %1678 = vmatprep.subr.mxu0 %v419
    %1679 = vmatpush1.msra.mxu0 %v418
    %1680 = vmatprep.subr.mxu0 %v417
    %1681 = vmatpush1.msra.mxu0 %v416
    %1682 = vmatprep.subr.mxu0 %v415
    %1683 = vmatpush1.msra.mxu0 %v414
    %1684 = vmatprep.subr.mxu0 0.0
    %1685 = vmatpush2.msra.mxu0 0.0
    %1686 = vmatprep.subr.mxu0 0.0
    %1687 = vmatpush2.msra.mxu0 0.0
    %1688 = vmatprep.subr.mxu0 0.0
    %1689 = vmatpush2.msra.mxu0 0.0
    %1690 = vmatprep.subr.mxu0 0.0
    %1691 = vmatpush2.msra.mxu0 0.0
    %1692 = vmatprep.subr.mxu0 0.0
    %1693 = vmatpush2.msra.mxu0 0.0
    %1694 = vmatprep.subr.mxu0 0.0
    %1695 = vmatpush2.msra.mxu0 0.0
    %1696 = vmatprep.subr.mxu0 0.0
    %1697 = vmatpush2.msra.mxu0 0.0
    %1698 = vmatprep.subr.mxu0 0.0
    %1699 = vmatpush2.msra.mxu0 0.0
    %1700 = vmatprep.subr.mxu0 0.0
    %1701 = vmatpush2.msra.mxu0 0.0
    %1702 = vmatprep.subr.mxu0 0.0
    %1703 = vmatpush2.msra.mxu0 0.0
    %1704 = vmatprep.subr.mxu0 0.0
    %1705 = vmatpush2.msra.mxu0 0.0
    %1706 = vmatprep.subr.mxu0 0.0
    %1707 = vmatpush2.msra.mxu0 0.0
    %1708 = vmatprep.subr.mxu0 0.0
    %1709 = vmatpush2.msra.mxu0 0.0
    %1710 = vmatprep.subr.mxu0 0.0
    %1711 = vmatpush2.msra.mxu0 0.0
    %1712 = vmatprep.subr.mxu0 0.0
    %1713 = vmatpush2.msra.mxu0 0.0
    %1714 = vmatprep.subr.mxu0 0.0
    %1715 = vmatpush2.msra.mxu0 0.0
    %1716 = vmatprep.mubr.f32.mxu0 0.0
    %1717 = vmatmul.mubr.f32.gmra.mxu0 %v1647
    %v1718 = vpop.f32.mrf.mxu0
    %v1719 = vadd.f32 0.0, %v1718
    %v1720 = vpop.f32.mrf.mxu0
    %v1721 = vadd.f32 0.0, %v1720
    %1722 = vdwg.mxu0
    %v1723 = vadd.f32 %v1649, %v1719
    %v1724 = vadd.f32 %v1650, %v1721
    %v1725 = vxor.u32 %v1723, 2147483648
    %v1726 = vxor.u32 %v1724, 2147483648
    %v1727 = vmul.f32 %v1725, 1.442695
    %v1728 = vpow.pop %v1727
    %v1729 = vmul.f32 %v1726, 1.442695
    %v1730 = vpow.pop %v1729
    %v1731 = vadd.f32 %v1728, 1.0
    %v1732 = vadd.f32 %v1730, 1.0
    %v1733 = vrcp.pop %v1731
    %v1734 = vmul.f32 1.0, %v1733
    %v1735 = vrcp.pop %v1732
    %v1736 = vmul.f32 1.0, %v1735
    %v1737 = vmul.f32 %v1736, %v1647
    %1738 = vmatprep.subr.mxu0 0.0
    %1739 = vmatpush1.msra.mxu0 %v547
    %1740 = vmatprep.subr.mxu0 0.0
    %1741 = vmatpush1.msra.mxu0 %v546
    %1742 = vmatprep.subr.mxu0 0.0
    %1743 = vmatpush1.msra.mxu0 %v545
    %1744 = vmatprep.subr.mxu0 0.0
    %1745 = vmatpush1.msra.mxu0 %v544
    %1746 = vmatprep.subr.mxu0 0.0
    %1747 = vmatpush1.msra.mxu0 %v543
    %1748 = vmatprep.subr.mxu0 0.0
    %1749 = vmatpush1.msra.mxu0 %v542
    %1750 = vmatprep.subr.mxu0 0.0
    %1751 = vmatpush1.msra.mxu0 %v541
    %1752 = vmatprep.subr.mxu0 0.0
    %1753 = vmatpush1.msra.mxu0 %v540
    %1754 = vmatprep.subr.mxu0 0.0
    %1755 = vmatpush1.msra.mxu0 %v539
    %1756 = vmatprep.subr.mxu0 0.0
    %1757 = vmatpush1.msra.mxu0 %v538
    %1758 = vmatprep.subr.mxu0 0.0
    %1759 = vmatpush1.msra.mxu0 %v537
    %1760 = vmatprep.subr.mxu0 0.0
    %1761 = vmatpush1.msra.mxu0 %v536
    %1762 = vmatprep.subr.mxu0 0.0
    %1763 = vmatpush1.msra.mxu0 %v535
    %1764 = vmatprep.subr.mxu0 0.0
    %1765 = vmatpush1.msra.mxu0 %v534
    %1766 = vmatprep.subr.mxu0 0.0
    %1767 = vmatpush1.msra.mxu0 %v533
    %1768 = vmatprep.subr.mxu0 0.0
    %1769 = vmatpush1.msra.mxu0 %v532
    %1770 = vmatprep.subr.mxu0 0.0
    %1771 = vmatpush2.msra.mxu0 0.0
    %1772 = vmatprep.subr.mxu0 0.0
    %1773 = vmatpush2.msra.mxu0 0.0
    %1774 = vmatprep.subr.mxu0 0.0
    %1775 = vmatpush2.msra.mxu0 0.0
    %1776 = vmatprep.subr.mxu0 0.0
    %1777 = vmatpush2.msra.mxu0 0.0
    %1778 = vmatprep.subr.mxu0 0.0
    %1779 = vmatpush2.msra.mxu0 0.0
    %1780 = vmatprep.subr.mxu0 0.0
    %1781 = vmatpush2.msra.mxu0 0.0
    %1782 = vmatprep.subr.mxu0 0.0
    %1783 = vmatpush2.msra.mxu0 0.0
    %1784 = vmatprep.subr.mxu0 0.0
    %1785 = vmatpush2.msra.mxu0 0.0
    %1786 = vmatprep.subr.mxu0 0.0
    %1787 = vmatpush2.msra.mxu0 0.0
    %1788 = vmatprep.subr.mxu0 0.0
    %1789 = vmatpush2.msra.mxu0 0.0
    %1790 = vmatprep.subr.mxu0 0.0
    %1791 = vmatpush2.msra.mxu0 0.0
    %1792 = vmatprep.subr.mxu0 0.0
    %1793 = vmatpush2.msra.mxu0 0.0
    %1794 = vmatprep.subr.mxu0 0.0
    %1795 = vmatpush2.msra.mxu0 0.0
    %1796 = vmatprep.subr.mxu0 0.0
    %1797 = vmatpush2.msra.mxu0 0.0
    %1798 = vmatprep.subr.mxu0 0.0
    %1799 = vmatpush2.msra.mxu0 0.0
    %1800 = vmatprep.subr.mxu0 0.0
    %1801 = vmatpush2.msra.mxu0 0.0
    %1802 = vmatprep.mubr.f32.mxu0 0.0
    %1803 = vmatmul.mubr.f32.gmra.mxu0 %v1737
    %v1804 = vpop.f32.mrf.mxu0
    %v1805 = vadd.f32 0.0, %v1804
    %v1806 = vpop.f32.mrf.mxu0
    %1807 = vdwg.mxu0
    %v1808 = vadd.f32 %v1651, %v1805
    %v1809 = vxor.u32 %v1808, 2147483648
    %v1810 = vmul.f32 %v1809, 1.442695
    %v1811 = vpow.pop %v1810
    %v1812 = vadd.f32 %v1811, 1.0
    %v1813 = vrcp.pop %v1812
    %v1814 = vmul.f32 1.0, %v1813
    %v1815 = vsub.f32 %v1814, %v1647
    %v1816 = vmul.f32 %v1734, %v1815
    %v1817 = vadd.f32 %v1647, %v1816
    %1818 = vst [vmem:[#allocation12] sm:$0xff] %v1817
    // Predicated region
    $region38: #{tpu_custom_call.1} parent=1 // pred_check
      _
    $region39: #{tpu_custom_call.1} parent=1 // pred_check_branch
      %1820 = sbr.rel (0) target = $region41
    $region40: #{tpu_custom_call.1} parent=1 // pred_region
      %s1822 = ssub.s32 128, 128
      %1823 = vsyncadd [#allocation9], %s1822
      %s1825 = sshll.u32 [#allocation12], 4
      %s1826 = int_to_ptr.vmem [resolvable:$true] %s1825
      %1828 = dma.vmem_to_hbm [thread:$0]  %s1826, 128, %s6, [#allocation9]
    $region41: #{tpu_custom_call.1} parent=1 // pred_fallthru
      _
    // Predicated region
    $region42: #{tpu_custom_call.1} parent=1 // pred_check
      _
    $region43: #{tpu_custom_call.1} parent=1 // pred_check_branch
      %1830 = sbr.rel (0) target = $region45
    $region44: #{tpu_custom_call.1} parent=1 // pred_region
      %1831 = dma.done [#allocation9], 128
    $region45: #{tpu_custom_call.1} parent=1 // pred_fallthru
      _
    %1832 = vsyncpa [#allocation8], 1
    %1833 = vsyncpa [#allocation11], 1
    %1834 = vsyncpa [#allocation9], 1
  %1835 = vsyncmov [#allocation5]
  %s1836 = vpop.sfrf %1835
  %p1837 = scmp.eq.s32.totalorder %s1836, 0
  %p1838 = pneg %p1837
  %1840 = shalt.err (%p1838)
  %s1841 = scalar_lea.sflag [#allocation5], 1
  %1842 = vsyncmov %s1841
  %s1843 = vpop.sfrf %1842
  %p1844 = scmp.eq.s32.totalorder %s1843, 0
  %p1845 = pneg %p1844
  %1847 = shalt.err (%p1845)
  %s1848 = scalar_lea.sflag [#allocation5], 2
  %1849 = vsyncmov %s1848
  %s1850 = vpop.sfrf %1849
  %p1851 = scmp.eq.s32.totalorder %s1850, 0
  %p1852 = pneg %p1851
  %1854 = shalt.err (%p1852)

</llo_original>
